<compile_context>
chip_gen: v7x
topology: tpu7x:2x2x1
jax: 0.10.0
libtpu: 0.0.40
codegen_flags: <defaults>
</compile_context>

<pallas_src>
import jax
import jax.numpy as jnp
from jax.experimental import pallas as pl
from jax.experimental.pallas import tpu as pltpu


def make_kernel(B, N, in_feats, h_feats, out_feats):
    """Build the fused kernel with static shape/offset constants baked in."""
    # Row offsets inside the 4th column block (cols 3h:4h) of the packed slab.
    r_fc = 0
    r_cls = in_feats
    r_b = in_feats + out_feats
    r_bcls = r_b + 4
    c0 = 3 * h_feats
    BN = B * N

    def kernel(x_ref, a_ref, w_ref, out_ref):
        """
        x_ref : [B*N, in_feats]   node features, all graphs stacked
        a_ref : [B, N, N]         per-graph normalized adjacency diag(n) A diag(n)
        w_ref : [h, 4h]           packed parameter slab (see pack_params)
        out_ref : [B, out_feats]
        """
        w = w_ref[...]                                         # one load of 16 KiB
        w_fc = w[r_fc:r_fc + in_feats, c0:c0 + h_feats]        # [in, h]
        w_cls_t = w[r_cls:r_cls + out_feats, c0:c0 + h_feats]  # [out, h]
        biases = w[r_b:r_b + 4, c0:c0 + h_feats]               # [4, h]
        b_cls = w[r_bcls:r_bcls + 1, c0:c0 + out_feats]        # [1, out]

        # SLP: h = relu(x @ W_fc + b_fc)
        h = jnp.dot(x_ref[...], w_fc, preferred_element_type=jnp.float32)
        h = jnp.maximum(h + biases[0:1, :], 0.0)               # [BN, h]

        a_hat = a_ref[...]                                     # [B, N, N]

        # 3 GCN layers: norm*(A @ (norm*h)) == A_hat @ h (normalization pre-folded)
        for l in range(3):
            hb = h.reshape(B, N, h_feats)
            agg = jnp.einsum("bnm,bmf->bnf", a_hat, hb,
                             preferred_element_type=jnp.float32)
            agg = agg.reshape(BN, h_feats)
            w_l = w[:, l * h_feats:(l + 1) * h_feats]          # [h, h] static slice
            h = jnp.dot(agg, w_l, preferred_element_type=jnp.float32)
            h = jnp.maximum(h + biases[l + 1:l + 2, :], 0.0)

        # dgl.mean_nodes: mean over each graph's N nodes -> [B, h]
        graph_repr = jnp.mean(h.reshape(B, N, h_feats), axis=1)

        # classifier (w_cls stored transposed; contract on the shared h dim)
        out = jnp.einsum("bh,oh->bo", graph_repr, w_cls_t,
                         preferred_element_type=jnp.float32) + b_cls
        out_ref[...] = out

    return kernel


def pack_params(params, in_feats, h_feats, out_feats):
    """One-time, call-path-free packing of all parameters into a [h, 4h] slab.

    Columns [0,h)   : w_g1          Columns [h,2h) : w_g2       Columns [2h,3h): w_g3
    Columns [3h,4h) : rows [0,in)           = w_fc
                      rows [in,in+out)      = w_cls^T
                      rows [.., ..+4)       = b_fc, b_g1, b_g2, b_g3
                      next row (first out cols) = b_cls
    """
    assert in_feats + out_feats + 5 <= h_feats, "packing layout needs h_feats >= in+out+5"
    W = jnp.zeros((h_feats, 4 * h_feats), dtype=jnp.float32)
    W = W.at[:, 0 * h_feats:1 * h_feats].set(params["w_g1"])
    W = W.at[:, 1 * h_feats:2 * h_feats].set(params["w_g2"])
    W = W.at[:, 2 * h_feats:3 * h_feats].set(params["w_g3"])
    c0 = 3 * h_feats
    r = 0
    W = W.at[r:r + in_feats, c0:c0 + h_feats].set(params["w_fc"]); r += in_feats
    W = W.at[r:r + out_feats, c0:c0 + h_feats].set(params["w_cls"].T); r += out_feats
    b_hidden = jnp.concatenate(
        [params["b_fc"], params["b_g1"], params["b_g2"], params["b_g3"]], axis=0)
    W = W.at[r:r + 4, c0:c0 + h_feats].set(b_hidden); r += 4
    W = W.at[r:r + 1, c0:c0 + out_feats].set(params["b_cls"])
    return W


def make_forward(B, N, in_feats, h_feats, out_feats):
    """Build the pallas_call once, return a jitted forward(x, adj, norm, w_slab)."""
    kernel = make_kernel(B, N, in_feats, h_feats, out_feats)
    vmem = pl.BlockSpec(memory_space=pltpu.MemorySpace.VMEM)

    call = pl.pallas_call(
        kernel,
        out_shape=jax.ShapeDtypeStruct((B, out_feats), jnp.float32),
        in_specs=[vmem, vmem, vmem],
        out_specs=vmem,
    )

    @jax.jit
    def forward(x, adj, norm, w_slab):
        # Fold the symmetric degree normalization into the adjacency once per call.
        a_hat = adj * norm * jnp.swapaxes(norm, 1, 2)          # [B, N, N]
        x_slab = x.reshape(B * N, in_feats)                    # [BN, in]
        return call(x_slab, a_hat, w_slab)

    return forward


def reference_forward(x, adj, norm, params):
    """Pure-JAX reference mirroring the PyTorch/DGL semantics."""
    h = jax.nn.relu(x @ params["w_fc"] + params["b_fc"])
    for wk, bk in (("w_g1", "b_g1"), ("w_g2", "b_g2"), ("w_g3", "b_g3")):
        hn = h * norm
        agg = jnp.einsum("bvu,buf->bvf", adj, hn) * norm
        h = jax.nn.relu(agg @ params[wk] + params[bk])
    graph_repr = jnp.mean(h, axis=1)          # [B, h_feats]
    return graph_repr @ params["w_cls"] + params["b_cls"]


if __name__ == "__main__":
    # Small, deterministic problem: 4 graphs ("4graph"), 16 nodes each.
    B, N = 4, 16
    in_feats, h_feats, out_feats = 8, 32, 4

    key = jax.random.PRNGKey(0)
    k_x, k_a, k_w = jax.random.split(key, 3)

    # Node features.
    x = jax.random.normal(k_x, (B, N, in_feats), dtype=jnp.float32)

    # Random symmetric adjacency (undirected graphs, no self-loops).
    raw = jax.random.uniform(k_a, (B, N, N))
    adj = (raw < 0.3).astype(jnp.float32)
    adj = jnp.maximum(adj, jnp.swapaxes(adj, 1, 2))
    adj = adj * (1.0 - jnp.eye(N, dtype=jnp.float32)[None])

    # DGL 'both' normalization: deg^{-1/2}, zero-degree clamped to 1.
    deg = jnp.sum(adj, axis=2, keepdims=True)          # [B, N, 1]
    deg = jnp.maximum(deg, 1.0)
    norm = 1.0 / jnp.sqrt(deg)

    # Deterministic synthetic parameters (shapes match the nn.Module __init__).
    kws = jax.random.split(k_w, 10)
    params = {
        "w_fc":  jax.random.normal(kws[0], (in_feats, h_feats)) * 0.1,
        "b_fc":  jax.random.normal(kws[1], (1, h_feats)) * 0.1,
        "w_g1":  jax.random.normal(kws[2], (h_feats, h_feats)) * 0.1,
        "b_g1":  jax.random.normal(kws[3], (1, h_feats)) * 0.1,
        "w_g2":  jax.random.normal(kws[4], (h_feats, h_feats)) * 0.1,
        "b_g2":  jax.random.normal(kws[5], (1, h_feats)) * 0.1,
        "w_g3":  jax.random.normal(kws[6], (h_feats, h_feats)) * 0.1,
        "b_g3":  jax.random.normal(kws[7], (1, h_feats)) * 0.1,
        "w_cls": jax.random.normal(kws[8], (h_feats, out_feats)) * 0.1,
        "b_cls": jax.random.normal(kws[9], (1, out_feats)) * 0.1,
    }
    params = {k: v.astype(jnp.float32) for k, v in params.items()}

    # One-time parameter packing (outside the per-call / jitted path).
    w_slab = jax.block_until_ready(pack_params(params, in_feats, h_feats, out_feats))

    forward = make_forward(B, N, in_feats, h_feats, out_feats)

    # TODO(synk): assumes every graph has exactly N real nodes (no padding mask /
    # per-graph node counts), same as the original dense-batched setup.
    out = forward(x, adj, norm, w_slab)
    out = jax.block_until_ready(out)

    ref = reference_forward(x, adj, norm, params)
    assert out.shape == (B, out_feats)
    # Both paths use the TPU's default (bf16-pass) matmul precision; tolerance is
    # set to cover contraction-order differences without hiding real bugs.
    assert jnp.allclose(out, ref, atol=1e-3, rtol=1e-3), "mismatch vs JAX reference"

    print("KERNEL_OK")
</pallas_src>

<mosaic_0001>
module attributes {stable_mosaic.version = 11 : i64} {
  func.func @kernel(%arg0: memref<64x8xf32, #tpu.memory_space<vmem>>, %arg1: memref<4x16x16xf32, #tpu.memory_space<vmem>>, %arg2: memref<32x128xf32, #tpu.memory_space<vmem>>, %arg3: memref<4x4xf32, #tpu.memory_space<vmem>>) attributes {dimension_semantics = [], scalar_prefetch = 0 : i64, scratch_operands = 0 : i64, tpu.core_type = #tpu.core_type<tc>} {
    %c0 = arith.constant 0 : index
    %c0_0 = arith.constant 0 : index
    %0 = vector.load %arg2[%c0, %c0_0] : memref<32x128xf32, #tpu.memory_space<vmem>>, vector<32x128xf32>
    %1 = vector.extract_strided_slice %0 {offsets = [0, 96], sizes = [8, 32], strides = [1, 1]} : vector<32x128xf32> to vector<8x32xf32>
    %2 = vector.extract_strided_slice %0 {offsets = [8, 96], sizes = [4, 32], strides = [1, 1]} : vector<32x128xf32> to vector<4x32xf32>
    %3 = vector.extract_strided_slice %0 {offsets = [12, 96], sizes = [4, 32], strides = [1, 1]} : vector<32x128xf32> to vector<4x32xf32>
    %4 = vector.extract_strided_slice %0 {offsets = [16, 96], sizes = [1, 4], strides = [1, 1]} : vector<32x128xf32> to vector<1x4xf32>
    %c0_1 = arith.constant 0 : index
    %c0_2 = arith.constant 0 : index
    %5 = vector.load %arg0[%c0_1, %c0_2] : memref<64x8xf32, #tpu.memory_space<vmem>>, vector<64x8xf32>
    %cst = arith.constant dense<0.000000e+00> : vector<64x32xf32>
    %6 = tpu.matmul %5, %1, %cst {dimension_numbers = #tpu.dot_dimension_numbers<[1], [0], [0], [1], [0, 0, 1, 1], [], []>} : vector<64x8xf32>, vector<8x32xf32>, vector<64x32xf32> -> vector<64x32xf32>
    %7 = vector.extract_strided_slice %3 {offsets = [0, 0], sizes = [1, 32], strides = [1, 1]} : vector<4x32xf32> to vector<1x32xf32>
    %8 = vector.broadcast %7 : vector<1x32xf32> to vector<64x32xf32>
    %9 = arith.addf %6, %8 : vector<64x32xf32>
    %cst_3 = arith.constant 0.000000e+00 : f32
    %10 = vector.broadcast %cst_3 : f32 to vector<64x32xf32>
    %11 = arith.maximumf %9, %10 : vector<64x32xf32>
    %c0_4 = arith.constant 0 : index
    %c0_5 = arith.constant 0 : index
    %c0_6 = arith.constant 0 : index
    %12 = vector.load %arg1[%c0_4, %c0_5, %c0_6] : memref<4x16x16xf32, #tpu.memory_space<vmem>>, vector<4x16x16xf32>
    %13 = vector.shape_cast %11 : vector<64x32xf32> to vector<4x16x32xf32>
    "tpu.trace_start"() <{level = 10 : i32, message = "bnm,bmf->bnf"}> : () -> ()
    %cst_7 = arith.constant dense<0.000000e+00> : vector<4x16x32xf32>
    %14 = tpu.matmul %12, %13, %cst_7 {dimension_numbers = #tpu.dot_dimension_numbers<[2], [1], [1], [2], [0, 0, 0, 1, 1, 2], [0], [0]>} : vector<4x16x16xf32>, vector<4x16x32xf32>, vector<4x16x32xf32> -> vector<4x16x32xf32>
    "tpu.trace_stop"() : () -> ()
    %15 = vector.shape_cast %14 : vector<4x16x32xf32> to vector<64x32xf32>
    %16 = vector.extract_strided_slice %0 {offsets = [0, 0], sizes = [32, 32], strides = [1, 1]} : vector<32x128xf32> to vector<32x32xf32>
    %cst_8 = arith.constant dense<0.000000e+00> : vector<64x32xf32>
    %17 = tpu.matmul %15, %16, %cst_8 {dimension_numbers = #tpu.dot_dimension_numbers<[1], [0], [0], [1], [0, 0, 1, 1], [], []>} : vector<64x32xf32>, vector<32x32xf32>, vector<64x32xf32> -> vector<64x32xf32>
    %18 = vector.extract_strided_slice %3 {offsets = [1, 0], sizes = [1, 32], strides = [1, 1]} : vector<4x32xf32> to vector<1x32xf32>
    %19 = vector.broadcast %18 : vector<1x32xf32> to vector<64x32xf32>
    %20 = arith.addf %17, %19 : vector<64x32xf32>
    %cst_9 = arith.constant 0.000000e+00 : f32
    %21 = vector.broadcast %cst_9 : f32 to vector<64x32xf32>
    %22 = arith.maximumf %20, %21 : vector<64x32xf32>
    %23 = vector.shape_cast %22 : vector<64x32xf32> to vector<4x16x32xf32>
    "tpu.trace_start"() <{level = 10 : i32, message = "bnm,bmf->bnf"}> : () -> ()
    %cst_10 = arith.constant dense<0.000000e+00> : vector<4x16x32xf32>
    %24 = tpu.matmul %12, %23, %cst_10 {dimension_numbers = #tpu.dot_dimension_numbers<[2], [1], [1], [2], [0, 0, 0, 1, 1, 2], [0], [0]>} : vector<4x16x16xf32>, vector<4x16x32xf32>, vector<4x16x32xf32> -> vector<4x16x32xf32>
    "tpu.trace_stop"() : () -> ()
    %25 = vector.shape_cast %24 : vector<4x16x32xf32> to vector<64x32xf32>
    %26 = vector.extract_strided_slice %0 {offsets = [0, 32], sizes = [32, 32], strides = [1, 1]} : vector<32x128xf32> to vector<32x32xf32>
    %cst_11 = arith.constant dense<0.000000e+00> : vector<64x32xf32>
    %27 = tpu.matmul %25, %26, %cst_11 {dimension_numbers = #tpu.dot_dimension_numbers<[1], [0], [0], [1], [0, 0, 1, 1], [], []>} : vector<64x32xf32>, vector<32x32xf32>, vector<64x32xf32> -> vector<64x32xf32>
    %28 = vector.extract_strided_slice %3 {offsets = [2, 0], sizes = [1, 32], strides = [1, 1]} : vector<4x32xf32> to vector<1x32xf32>
    %29 = vector.broadcast %28 : vector<1x32xf32> to vector<64x32xf32>
    %30 = arith.addf %27, %29 : vector<64x32xf32>
    %cst_12 = arith.constant 0.000000e+00 : f32
    %31 = vector.broadcast %cst_12 : f32 to vector<64x32xf32>
    %32 = arith.maximumf %30, %31 : vector<64x32xf32>
    %33 = vector.shape_cast %32 : vector<64x32xf32> to vector<4x16x32xf32>
    "tpu.trace_start"() <{level = 10 : i32, message = "bnm,bmf->bnf"}> : () -> ()
    %cst_13 = arith.constant dense<0.000000e+00> : vector<4x16x32xf32>
    %34 = tpu.matmul %12, %33, %cst_13 {dimension_numbers = #tpu.dot_dimension_numbers<[2], [1], [1], [2], [0, 0, 0, 1, 1, 2], [0], [0]>} : vector<4x16x16xf32>, vector<4x16x32xf32>, vector<4x16x32xf32> -> vector<4x16x32xf32>
    "tpu.trace_stop"() : () -> ()
    %35 = vector.shape_cast %34 : vector<4x16x32xf32> to vector<64x32xf32>
    %36 = vector.extract_strided_slice %0 {offsets = [0, 64], sizes = [32, 32], strides = [1, 1]} : vector<32x128xf32> to vector<32x32xf32>
    %cst_14 = arith.constant dense<0.000000e+00> : vector<64x32xf32>
    %37 = tpu.matmul %35, %36, %cst_14 {dimension_numbers = #tpu.dot_dimension_numbers<[1], [0], [0], [1], [0, 0, 1, 1], [], []>} : vector<64x32xf32>, vector<32x32xf32>, vector<64x32xf32> -> vector<64x32xf32>
    %38 = vector.extract_strided_slice %3 {offsets = [3, 0], sizes = [1, 32], strides = [1, 1]} : vector<4x32xf32> to vector<1x32xf32>
    %39 = vector.broadcast %38 : vector<1x32xf32> to vector<64x32xf32>
    %40 = arith.addf %37, %39 : vector<64x32xf32>
    %cst_15 = arith.constant 0.000000e+00 : f32
    %41 = vector.broadcast %cst_15 : f32 to vector<64x32xf32>
    %42 = arith.maximumf %40, %41 : vector<64x32xf32>
    %43 = vector.shape_cast %42 : vector<64x32xf32> to vector<4x16x32xf32>
    %cst_16 = arith.constant dense<0.000000e+00> : vector<4x32xf32>
    %44 = vector.multi_reduction <add>, %43, %cst_16 [1] : vector<4x16x32xf32> to vector<4x32xf32>
    %cst_17 = arith.constant 1.600000e+01 : f32
    %45 = vector.broadcast %cst_17 : f32 to vector<4x32xf32>
    %46 = arith.divf %44, %45 : vector<4x32xf32>
    "tpu.trace_start"() <{level = 10 : i32, message = "bh,oh->bo"}> : () -> ()
    %cst_18 = arith.constant dense<0.000000e+00> : vector<4x4xf32>
    %47 = tpu.matmul %46, %2, %cst_18 {dimension_numbers = #tpu.dot_dimension_numbers<[1], [1], [0], [0], [0, 0, 1, 0], [], []>} : vector<4x32xf32>, vector<4x32xf32>, vector<4x4xf32> -> vector<4x4xf32>
    "tpu.trace_stop"() : () -> ()
    %48 = vector.broadcast %4 : vector<1x4xf32> to vector<4x4xf32>
    %49 = arith.addf %47, %48 : vector<4x4xf32>
    %c0_19 = arith.constant 0 : index
    %c0_20 = arith.constant 0 : index
    %50 = vector.load %arg3[%c0_19, %c0_20] : memref<4x4xf32, #tpu.memory_space<vmem>>, vector<4x4xf32>
    tpu.vector_store %arg3[%c0_19, %c0_20], %49 {strides = array<i32>} : memref<4x4xf32, #tpu.memory_space<vmem>>, vector<4x4xf32>,
    return
  }
}

</mosaic_0001>

<llo_original>
// kernel: forward.1
$region0: #{forward.1}
  #allocation0 [shape = 'u32[]', space=smem, size = 0x4, offset = 0x4, fixed_abs, tag = 'smem constant byte address 0x4 - core index']
  #allocation1 [shape = 'u32[144,128]{1,0:T(1,128)}', space=vmem, size = 0x12000, scoped, tag = 'internal scratch']
  %s0 = inlined_call_operand.vmem [shape: f32[64,8], index: 0, kind: input, shape index: {}]
  %s1 = inlined_call_operand.vmem [shape: f32[4,16,16], index: 1, kind: input, shape index: {}]
  %s2 = inlined_call_operand.vmem [shape: f32[32,128], index: 2, kind: input, shape index: {}]
  %s3 = inlined_call_operand.hbm [shape: f32[4,4], index: 3, kind: output, shape index: {}]
  %s4 = sld [smem:[#allocation0]]
  $region22: #{forward.1} parent=0
    _
  %s6 = ssub.s32 1, %s4
  %s7 = scalar_select 0, %s6, %s4
  $region1: #{forward.1} parent=0
    #allocation2 [shape = 'u8[2048]{0}', space=vmem, size = 0x800, scoped, tag = 'output window, operand 0, single buffered']
    #allocation3 [shape = 's32[1]{0}', space=sflag, size = 0x4, scoped, tag = 'scoped memory for forward.1']
    %8 = vsyncpa [#allocation3], 0
    // Predicated region
    $region2: #{forward.1} parent=1 // pred_check
      _
    $region3: #{forward.1} parent=1 // pred_check_branch
      %10 = sbr.rel (0) target = $region5
    $region4: #{forward.1} parent=1 // pred_region
      _
    $region5: #{forward.1} parent=1 // pred_fallthru
      _
    // Predicated region
    $region6: #{forward.1} parent=1 // pred_check
      _
    $region7: #{forward.1} parent=1 // pred_check_branch
      %12 = sbr.rel (0) target = $region9
    $region8: #{forward.1} parent=1 // pred_region
      _
    $region9: #{forward.1} parent=1 // pred_fallthru
      _
    // Predicated region
    $region10: #{forward.1} parent=1 // pred_check
      _
    $region11: #{forward.1} parent=1 // pred_check_branch
      %14 = sbr.rel (0) target = $region13
    $region12: #{forward.1} parent=1 // pred_region
      _
    $region13: #{forward.1} parent=1 // pred_fallthru
      _
    %v15 = vld [vmem:[%s2] sm:$0xff]
    %v16 = vld [vmem:[%s2 + $0x8] sm:$0xff]
    %v17 = vld [vmem:[%s2 + $0x10] sm:$0xff]
    %v18 = vld [vmem:[%s2 + $0x18] sm:$0xff]
    %v19 = vld [vmem:[%s0] sm:$0xff]
    %v20 = vld [vmem:[%s0 + $0x8] sm:$0xff]
    %v21 = vld [vmem:[%s0 + $0x10] sm:$0xff]
    %v22 = vld [vmem:[%s0 + $0x18] sm:$0xff]
    %v23 = vld [vmem:[%s0 + $0x20] sm:$0xff]
    %v24 = vld [vmem:[%s0 + $0x28] sm:$0xff]
    %v25 = vld [vmem:[%s0 + $0x30] sm:$0xff]
    %v26 = vld [vmem:[%s0 + $0x38] sm:$0xff]
    %v27 = vlaneseq
    %v28 = vshrl.u32 %v27, 7
    %v29 = vsub.s32 4, %v28
    %v30 = vrot.slane %v16, %v29
    %32 = vrot.lane.b32.xlu0 %v15, 32
    %v33 = vpop.permute.xlu0 %32
    %36 = vrot.lane.b32.xlu0 %v30, 32
    %v37 = vpop.permute.xlu0 %36
    %vm39 = vcmask 64512
    %v41 = vsel %vm39, %v19, 0
    %v44 = vsel %vm39, %v20, 0
    %v47 = vsel %vm39, %v21, 0
    %v50 = vsel %vm39, %v22, 0
    %v53 = vsel %vm39, %v23, 0
    %v56 = vsel %vm39, %v24, 0
    %v59 = vsel %vm39, %v25, 0
    %v62 = vsel %vm39, %v26, 0
    %64 = vmatprep.subr.mxu0 0.0
    %65 = vmatpush1.msra.mxu0 %v33
    %66 = vmatprep.subr.mxu0 0.0
    %67 = vmatpush1.msra.mxu0 0.0
    %68 = vmatprep.subr.mxu0 0.0
    %69 = vmatpush1.msra.mxu0 0.0
    %70 = vmatprep.subr.mxu0 0.0
    %71 = vmatpush1.msra.mxu0 0.0
    %72 = vmatprep.subr.mxu0 0.0
    %73 = vmatpush1.msra.mxu0 0.0
    %74 = vmatprep.subr.mxu0 0.0
    %75 = vmatpush1.msra.mxu0 0.0
    %76 = vmatprep.subr.mxu0 0.0
    %77 = vmatpush1.msra.mxu0 0.0
    %78 = vmatprep.subr.mxu0 0.0
    %79 = vmatpush1.msra.mxu0 0.0
    %80 = vmatprep.subr.mxu0 0.0
    %81 = vmatpush1.msra.mxu0 0.0
    %82 = vmatprep.subr.mxu0 0.0
    %83 = vmatpush1.msra.mxu0 0.0
    %84 = vmatprep.subr.mxu0 0.0
    %85 = vmatpush1.msra.mxu0 0.0
    %86 = vmatprep.subr.mxu0 0.0
    %87 = vmatpush1.msra.mxu0 0.0
    %88 = vmatprep.subr.mxu0 0.0
    %89 = vmatpush1.msra.mxu0 0.0
    %90 = vmatprep.subr.mxu0 0.0
    %91 = vmatpush1.msra.mxu0 0.0
    %92 = vmatprep.subr.mxu0 0.0
    %93 = vmatpush1.msra.mxu0 0.0
    %94 = vmatprep.subr.mxu0 0.0
    %95 = vmatpush1.msra.mxu0 0.0
    %96 = vmatprep.subr.mxu0 0.0
    %97 = vmatpush1.msra.mxu0 0.0
    %98 = vmatprep.subr.mxu0 0.0
    %99 = vmatpush1.msra.mxu0 0.0
    %100 = vmatprep.subr.mxu0 0.0
    %101 = vmatpush1.msra.mxu0 0.0
    %102 = vmatprep.subr.mxu0 0.0
    %103 = vmatpush1.msra.mxu0 0.0
    %104 = vmatprep.subr.mxu0 0.0
    %105 = vmatpush1.msra.mxu0 0.0
    %106 = vmatprep.subr.mxu0 0.0
    %107 = vmatpush1.msra.mxu0 0.0
    %108 = vmatprep.subr.mxu0 0.0
    %109 = vmatpush1.msra.mxu0 0.0
    %110 = vmatprep.subr.mxu0 0.0
    %111 = vmatpush1.msra.mxu0 0.0
    %112 = vmatprep.subr.mxu0 0.0
    %113 = vmatpush1.msra.mxu0 0.0
    %114 = vmatprep.subr.mxu0 0.0
    %115 = vmatpush1.msra.mxu0 0.0
    %116 = vmatprep.subr.mxu0 0.0
    %117 = vmatpush1.msra.mxu0 0.0
    %118 = vmatprep.subr.mxu0 0.0
    %119 = vmatpush1.msra.mxu0 0.0
    %120 = vmatprep.subr.mxu0 0.0
    %121 = vmatpush1.msra.mxu0 0.0
    %122 = vmatprep.subr.mxu0 0.0
    %123 = vmatpush1.msra.mxu0 0.0
    %124 = vmatprep.subr.mxu0 0.0
    %125 = vmatpush1.msra.mxu0 0.0
    %126 = vmatprep.subr.mxu0 0.0
    %127 = vmatpush1.msra.mxu0 0.0
    %128 = vmatprep.mubr.f32.mxu0 0.0
    %129 = vmatmul.mubr.f32.gmra.mrb[0].mxu0 %v41
    %v130 = vpop.f32.mrb[0].mxu0
    %v131 = vadd.f32 %v37, %v130
    %v132 = vpop.f32.mrb[0].mxu0
    %133 = vmatprep.mubr.f32.mxu0 0.0
    %134 = vmatmul.mubr.f32.gmra.mrb[0].mxu0 %v44
    %v135 = vpop.f32.mrb[0].mxu0
    %v136 = vadd.f32 %v37, %v135
    %v137 = vpop.f32.mrb[0].mxu0
    %138 = vmatprep.mubr.f32.mxu0 0.0
    %139 = vmatmul.mubr.f32.gmra.mrb[0].mxu0 %v47
    %v140 = vpop.f32.mrb[0].mxu0
    %v141 = vadd.f32 %v37, %v140
    %v142 = vpop.f32.mrb[0].mxu0
    %143 = vmatprep.mubr.f32.mxu0 0.0
    %144 = vmatmul.mubr.f32.gmra.mrb[0].mxu0 %v50
    %v145 = vpop.f32.mrb[0].mxu0
    %v146 = vadd.f32 %v37, %v145
    %v147 = vpop.f32.mrb[0].mxu0
    %148 = vmatprep.mubr.f32.mxu0 0.0
    %149 = vmatmul.mubr.f32.gmra.mrb[0].mxu0 %v53
    %v150 = vpop.f32.mrb[0].mxu0
    %v151 = vadd.f32 %v37, %v150
    %v152 = vpop.f32.mrb[0].mxu0
    %153 = vmatprep.mubr.f32.mxu0 0.0
    %154 = vmatmul.mubr.f32.gmra.mrb[0].mxu0 %v56
    %v155 = vpop.f32.mrb[0].mxu0
    %v156 = vadd.f32 %v37, %v155
    %v157 = vpop.f32.mrb[0].mxu0
    %158 = vmatprep.mubr.f32.mxu0 0.0
    %159 = vmatmul.mubr.f32.gmra.mrb[0].mxu0 %v59
    %v160 = vpop.f32.mrb[0].mxu0
    %v161 = vadd.f32 %v37, %v160
    %v162 = vpop.f32.mrb[0].mxu0
    %163 = vmatprep.mubr.f32.mxu0 0.0
    %164 = vmatmul.mubr.f32.gmra.mrb[0].mxu0 %v62
    %v165 = vpop.f32.mrb[0].mxu0
    %v166 = vadd.f32 %v37, %v165
    %v167 = vpop.f32.mrb[0].mxu0
    %168 = vdwg.mxu0
    %v169 = vmax.f32 %v131, 0.0
    %v170 = vmax.f32 %v136, 0.0
    %v171 = vmax.f32 %v141, 0.0
    %v172 = vmax.f32 %v146, 0.0
    %v173 = vmax.f32 %v151, 0.0
    %v174 = vmax.f32 %v156, 0.0
    %v175 = vmax.f32 %v161, 0.0
    %v176 = vmax.f32 %v166, 0.0
    %v177 = vld [vmem:[%s1] sm:$0xff]
    %v178 = vld [vmem:[%s1 + $0x8] sm:$0xff]
    %v179 = vld [vmem:[%s1 + $0x10] sm:$0xff]
    %v180 = vld [vmem:[%s1 + $0x18] sm:$0xff]
    %v181 = vld [vmem:[%s1 + $0x20] sm:$0xff]
    %v182 = vld [vmem:[%s1 + $0x28] sm:$0xff]
    %v183 = vld [vmem:[%s1 + $0x30] sm:$0xff]
    %v184 = vld [vmem:[%s1 + $0x38] sm:$0xff]
    %vm185 = vcmask 130048
    %v187 = vsel %vm185, %v177, 0
    %v190 = vsel %vm185, %v178, 0
    %192 = vmatprep.subr.mxu0 0.0
    %193 = vmatpush1.msra.mxu0 %v169
    %194 = vmatprep.subr.mxu0 0.0
    %195 = vmatpush1.msra.mxu0 %v170
    %196 = vmatprep.subr.mxu0 0.0
    %197 = vmatpush1.msra.mxu0 0.0
    %198 = vmatprep.subr.mxu0 0.0
    %199 = vmatpush1.msra.mxu0 0.0
    %200 = vmatprep.subr.mxu0 0.0
    %201 = vmatpush1.msra.mxu0 0.0
    %202 = vmatprep.subr.mxu0 0.0
    %203 = vmatpush1.msra.mxu0 0.0
    %204 = vmatprep.subr.mxu0 0.0
    %205 = vmatpush1.msra.mxu0 0.0
    %206 = vmatprep.subr.mxu0 0.0
    %207 = vmatpush1.msra.mxu0 0.0
    %208 = vmatprep.subr.mxu0 0.0
    %209 = vmatpush1.msra.mxu0 0.0
    %210 = vmatprep.subr.mxu0 0.0
    %211 = vmatpush1.msra.mxu0 0.0
    %212 = vmatprep.subr.mxu0 0.0
    %213 = vmatpush1.msra.mxu0 0.0
    %214 = vmatprep.subr.mxu0 0.0
    %215 = vmatpush1.msra.mxu0 0.0
    %216 = vmatprep.subr.mxu0 0.0
    %217 = vmatpush1.msra.mxu0 0.0
    %218 = vmatprep.subr.mxu0 0.0
    %219 = vmatpush1.msra.mxu0 0.0
    %220 = vmatprep.subr.mxu0 0.0
    %221 = vmatpush1.msra.mxu0 0.0
    %222 = vmatprep.subr.mxu0 0.0
    %223 = vmatpush1.msra.mxu0 0.0
    %224 = vmatprep.subr.mxu0 0.0
    %225 = vmatpush1.msra.mxu0 0.0
    %226 = vmatprep.subr.mxu0 0.0
    %227 = vmatpush1.msra.mxu0 0.0
    %228 = vmatprep.subr.mxu0 0.0
    %229 = vmatpush1.msra.mxu0 0.0
    %230 = vmatprep.subr.mxu0 0.0
    %231 = vmatpush1.msra.mxu0 0.0
    %232 = vmatprep.subr.mxu0 0.0
    %233 = vmatpush1.msra.mxu0 0.0
    %234 = vmatprep.subr.mxu0 0.0
    %235 = vmatpush1.msra.mxu0 0.0
    %236 = vmatprep.subr.mxu0 0.0
    %237 = vmatpush1.msra.mxu0 0.0
    %238 = vmatprep.subr.mxu0 0.0
    %239 = vmatpush1.msra.mxu0 0.0
    %240 = vmatprep.subr.mxu0 0.0
    %241 = vmatpush1.msra.mxu0 0.0
    %242 = vmatprep.subr.mxu0 0.0
    %243 = vmatpush1.msra.mxu0 0.0
    %244 = vmatprep.subr.mxu0 0.0
    %245 = vmatpush1.msra.mxu0 0.0
    %246 = vmatprep.subr.mxu0 0.0
    %247 = vmatpush1.msra.mxu0 0.0
    %248 = vmatprep.subr.mxu0 0.0
    %249 = vmatpush1.msra.mxu0 0.0
    %250 = vmatprep.subr.mxu0 0.0
    %251 = vmatpush1.msra.mxu0 0.0
    %252 = vmatprep.subr.mxu0 0.0
    %253 = vmatpush1.msra.mxu0 0.0
    %254 = vmatprep.subr.mxu0 0.0
    %255 = vmatpush1.msra.mxu0 0.0
    %256 = vmatprep.mubr.f32.mxu0 0.0
    %257 = vmatmul.mubr.f32.gmra.mrb[0].mxu0 %v187
    %v258 = vpop.f32.mrb[0].mxu0
    %v259 = vadd.f32 0.0, %v258
    %v260 = vpop.f32.mrb[0].mxu0
    %261 = vmatprep.mubr.f32.mxu0 0.0
    %262 = vmatmul.mubr.f32.gmra.mrb[0].mxu0 %v190
    %v263 = vpop.f32.mrb[0].mxu0
    %v264 = vadd.f32 0.0, %v263
    %v265 = vpop.f32.mrb[0].mxu0
    %266 = vdwg.mxu0
    %v268 = vsel %vm185, %v179, 0
    %v271 = vsel %vm185, %v180, 0
    %273 = vmatprep.subr.mxu0 0.0
    %274 = vmatpush1.msra.mxu0 %v171
    %275 = vmatprep.subr.mxu0 0.0
    %276 = vmatpush1.msra.mxu0 %v172
    %277 = vmatprep.subr.mxu0 0.0
    %278 = vmatpush1.msra.mxu0 0.0
    %279 = vmatprep.subr.mxu0 0.0
    %280 = vmatpush1.msra.mxu0 0.0
    %281 = vmatprep.subr.mxu0 0.0
    %282 = vmatpush1.msra.mxu0 0.0
    %283 = vmatprep.subr.mxu0 0.0
    %284 = vmatpush1.msra.mxu0 0.0
    %285 = vmatprep.subr.mxu0 0.0
    %286 = vmatpush1.msra.mxu0 0.0
    %287 = vmatprep.subr.mxu0 0.0
    %288 = vmatpush1.msra.mxu0 0.0
    %289 = vmatprep.subr.mxu0 0.0
    %290 = vmatpush1.msra.mxu0 0.0
    %291 = vmatprep.subr.mxu0 0.0
    %292 = vmatpush1.msra.mxu0 0.0
    %293 = vmatprep.subr.mxu0 0.0
    %294 = vmatpush1.msra.mxu0 0.0
    %295 = vmatprep.subr.mxu0 0.0
    %296 = vmatpush1.msra.mxu0 0.0
    %297 = vmatprep.subr.mxu0 0.0
    %298 = vmatpush1.msra.mxu0 0.0
    %299 = vmatprep.subr.mxu0 0.0
    %300 = vmatpush1.msra.mxu0 0.0
    %301 = vmatprep.subr.mxu0 0.0
    %302 = vmatpush1.msra.mxu0 0.0
    %303 = vmatprep.subr.mxu0 0.0
    %304 = vmatpush1.msra.mxu0 0.0
    %305 = vmatprep.subr.mxu0 0.0
    %306 = vmatpush1.msra.mxu0 0.0
    %307 = vmatprep.subr.mxu0 0.0
    %308 = vmatpush1.msra.mxu0 0.0
    %309 = vmatprep.subr.mxu0 0.0
    %310 = vmatpush1.msra.mxu0 0.0
    %311 = vmatprep.subr.mxu0 0.0
    %312 = vmatpush1.msra.mxu0 0.0
    %313 = vmatprep.subr.mxu0 0.0
    %314 = vmatpush1.msra.mxu0 0.0
    %315 = vmatprep.subr.mxu0 0.0
    %316 = vmatpush1.msra.mxu0 0.0
    %317 = vmatprep.subr.mxu0 0.0
    %318 = vmatpush1.msra.mxu0 0.0
    %319 = vmatprep.subr.mxu0 0.0
    %320 = vmatpush1.msra.mxu0 0.0
    %321 = vmatprep.subr.mxu0 0.0
    %322 = vmatpush1.msra.mxu0 0.0
    %323 = vmatprep.subr.mxu0 0.0
    %324 = vmatpush1.msra.mxu0 0.0
    %325 = vmatprep.subr.mxu0 0.0
    %326 = vmatpush1.msra.mxu0 0.0
    %327 = vmatprep.subr.mxu0 0.0
    %328 = vmatpush1.msra.mxu0 0.0
    %329 = vmatprep.subr.mxu0 0.0
    %330 = vmatpush1.msra.mxu0 0.0
    %331 = vmatprep.subr.mxu0 0.0
    %332 = vmatpush1.msra.mxu0 0.0
    %333 = vmatprep.subr.mxu0 0.0
    %334 = vmatpush1.msra.mxu0 0.0
    %335 = vmatprep.subr.mxu0 0.0
    %336 = vmatpush1.msra.mxu0 0.0
    %337 = vmatprep.mubr.f32.mxu0 0.0
    %338 = vmatmul.mubr.f32.gmra.mrb[0].mxu0 %v268
    %v339 = vpop.f32.mrb[0].mxu0
    %v340 = vadd.f32 0.0, %v339
    %v341 = vpop.f32.mrb[0].mxu0
    %342 = vmatprep.mubr.f32.mxu0 0.0
    %343 = vmatmul.mubr.f32.gmra.mrb[0].mxu0 %v271
    %v344 = vpop.f32.mrb[0].mxu0
    %v345 = vadd.f32 0.0, %v344
    %v346 = vpop.f32.mrb[0].mxu0
    %347 = vdwg.mxu0
    %v349 = vsel %vm185, %v181, 0
    %v352 = vsel %vm185, %v182, 0
    %354 = vmatprep.subr.mxu0 0.0
    %355 = vmatpush1.msra.mxu0 %v173
    %356 = vmatprep.subr.mxu0 0.0
    %357 = vmatpush1.msra.mxu0 %v174
    %358 = vmatprep.subr.mxu0 0.0
    %359 = vmatpush1.msra.mxu0 0.0
    %360 = vmatprep.subr.mxu0 0.0
    %361 = vmatpush1.msra.mxu0 0.0
    %362 = vmatprep.subr.mxu0 0.0
    %363 = vmatpush1.msra.mxu0 0.0
    %364 = vmatprep.subr.mxu0 0.0
    %365 = vmatpush1.msra.mxu0 0.0
    %366 = vmatprep.subr.mxu0 0.0
    %367 = vmatpush1.msra.mxu0 0.0
    %368 = vmatprep.subr.mxu0 0.0
    %369 = vmatpush1.msra.mxu0 0.0
    %370 = vmatprep.subr.mxu0 0.0
    %371 = vmatpush1.msra.mxu0 0.0
    %372 = vmatprep.subr.mxu0 0.0
    %373 = vmatpush1.msra.mxu0 0.0
    %374 = vmatprep.subr.mxu0 0.0
    %375 = vmatpush1.msra.mxu0 0.0
    %376 = vmatprep.subr.mxu0 0.0
    %377 = vmatpush1.msra.mxu0 0.0
    %378 = vmatprep.subr.mxu0 0.0
    %379 = vmatpush1.msra.mxu0 0.0
    %380 = vmatprep.subr.mxu0 0.0
    %381 = vmatpush1.msra.mxu0 0.0
    %382 = vmatprep.subr.mxu0 0.0
    %383 = vmatpush1.msra.mxu0 0.0
    %384 = vmatprep.subr.mxu0 0.0
    %385 = vmatpush1.msra.mxu0 0.0
    %386 = vmatprep.subr.mxu0 0.0
    %387 = vmatpush1.msra.mxu0 0.0
    %388 = vmatprep.subr.mxu0 0.0
    %389 = vmatpush1.msra.mxu0 0.0
    %390 = vmatprep.subr.mxu0 0.0
    %391 = vmatpush1.msra.mxu0 0.0
    %392 = vmatprep.subr.mxu0 0.0
    %393 = vmatpush1.msra.mxu0 0.0
    %394 = vmatprep.subr.mxu0 0.0
    %395 = vmatpush1.msra.mxu0 0.0
    %396 = vmatprep.subr.mxu0 0.0
    %397 = vmatpush1.msra.mxu0 0.0
    %398 = vmatprep.subr.mxu0 0.0
    %399 = vmatpush1.msra.mxu0 0.0
    %400 = vmatprep.subr.mxu0 0.0
    %401 = vmatpush1.msra.mxu0 0.0
    %402 = vmatprep.subr.mxu0 0.0
    %403 = vmatpush1.msra.mxu0 0.0
    %404 = vmatprep.subr.mxu0 0.0
    %405 = vmatpush1.msra.mxu0 0.0
    %406 = vmatprep.subr.mxu0 0.0
    %407 = vmatpush1.msra.mxu0 0.0
    %408 = vmatprep.subr.mxu0 0.0
    %409 = vmatpush1.msra.mxu0 0.0
    %410 = vmatprep.subr.mxu0 0.0
    %411 = vmatpush1.msra.mxu0 0.0
    %412 = vmatprep.subr.mxu0 0.0
    %413 = vmatpush1.msra.mxu0 0.0
    %414 = vmatprep.subr.mxu0 0.0
    %415 = vmatpush1.msra.mxu0 0.0
    %416 = vmatprep.subr.mxu0 0.0
    %417 = vmatpush1.msra.mxu0 0.0
    %418 = vmatprep.mubr.f32.mxu0 0.0
    %419 = vmatmul.mubr.f32.gmra.mrb[0].mxu0 %v349
    %v420 = vpop.f32.mrb[0].mxu0
    %v421 = vadd.f32 0.0, %v420
    %v422 = vpop.f32.mrb[0].mxu0
    %423 = vmatprep.mubr.f32.mxu0 0.0
    %424 = vmatmul.mubr.f32.gmra.mrb[0].mxu0 %v352
    %v425 = vpop.f32.mrb[0].mxu0
    %v426 = vadd.f32 0.0, %v425
    %v427 = vpop.f32.mrb[0].mxu0
    %428 = vdwg.mxu0
    %v430 = vsel %vm185, %v183, 0
    %v433 = vsel %vm185, %v184, 0
    %435 = vmatprep.subr.mxu0 0.0
    %436 = vmatpush1.msra.mxu0 %v175
    %437 = vmatprep.subr.mxu0 0.0
    %438 = vmatpush1.msra.mxu0 %v176
    %439 = vmatprep.subr.mxu0 0.0
    %440 = vmatpush1.msra.mxu0 0.0
    %441 = vmatprep.subr.mxu0 0.0
    %442 = vmatpush1.msra.mxu0 0.0
    %443 = vmatprep.subr.mxu0 0.0
    %444 = vmatpush1.msra.mxu0 0.0
    %445 = vmatprep.subr.mxu0 0.0
    %446 = vmatpush1.msra.mxu0 0.0
    %447 = vmatprep.subr.mxu0 0.0
    %448 = vmatpush1.msra.mxu0 0.0
    %449 = vmatprep.subr.mxu0 0.0
    %450 = vmatpush1.msra.mxu0 0.0
    %451 = vmatprep.subr.mxu0 0.0
    %452 = vmatpush1.msra.mxu0 0.0
    %453 = vmatprep.subr.mxu0 0.0
    %454 = vmatpush1.msra.mxu0 0.0
    %455 = vmatprep.subr.mxu0 0.0
    %456 = vmatpush1.msra.mxu0 0.0
    %457 = vmatprep.subr.mxu0 0.0
    %458 = vmatpush1.msra.mxu0 0.0
    %459 = vmatprep.subr.mxu0 0.0
    %460 = vmatpush1.msra.mxu0 0.0
    %461 = vmatprep.subr.mxu0 0.0
    %462 = vmatpush1.msra.mxu0 0.0
    %463 = vmatprep.subr.mxu0 0.0
    %464 = vmatpush1.msra.mxu0 0.0
    %465 = vmatprep.subr.mxu0 0.0
    %466 = vmatpush1.msra.mxu0 0.0
    %467 = vmatprep.subr.mxu0 0.0
    %468 = vmatpush1.msra.mxu0 0.0
    %469 = vmatprep.subr.mxu0 0.0
    %470 = vmatpush1.msra.mxu0 0.0
    %471 = vmatprep.subr.mxu0 0.0
    %472 = vmatpush1.msra.mxu0 0.0
    %473 = vmatprep.subr.mxu0 0.0
    %474 = vmatpush1.msra.mxu0 0.0
    %475 = vmatprep.subr.mxu0 0.0
    %476 = vmatpush1.msra.mxu0 0.0
    %477 = vmatprep.subr.mxu0 0.0
    %478 = vmatpush1.msra.mxu0 0.0
    %479 = vmatprep.subr.mxu0 0.0
    %480 = vmatpush1.msra.mxu0 0.0
    %481 = vmatprep.subr.mxu0 0.0
    %482 = vmatpush1.msra.mxu0 0.0
    %483 = vmatprep.subr.mxu0 0.0
    %484 = vmatpush1.msra.mxu0 0.0
    %485 = vmatprep.subr.mxu0 0.0
    %486 = vmatpush1.msra.mxu0 0.0
    %487 = vmatprep.subr.mxu0 0.0
    %488 = vmatpush1.msra.mxu0 0.0
    %489 = vmatprep.subr.mxu0 0.0
    %490 = vmatpush1.msra.mxu0 0.0
    %491 = vmatprep.subr.mxu0 0.0
    %492 = vmatpush1.msra.mxu0 0.0
    %493 = vmatprep.subr.mxu0 0.0
    %494 = vmatpush1.msra.mxu0 0.0
    %495 = vmatprep.subr.mxu0 0.0
    %496 = vmatpush1.msra.mxu0 0.0
    %497 = vmatprep.subr.mxu0 0.0
    %498 = vmatpush1.msra.mxu0 0.0
    %499 = vmatprep.mubr.f32.mxu0 0.0
    %500 = vmatmul.mubr.f32.gmra.mrb[0].mxu0 %v430
    %v501 = vpop.f32.mrb[0].mxu0
    %v502 = vadd.f32 0.0, %v501
    %v503 = vpop.f32.mrb[0].mxu0
    %504 = vmatprep.mubr.f32.mxu0 0.0
    %505 = vmatmul.mubr.f32.gmra.mrb[0].mxu0 %v433
    %v506 = vpop.f32.mrb[0].mxu0
    %v507 = vadd.f32 0.0, %v506
    %v508 = vpop.f32.mrb[0].mxu0
    %509 = vdwg.mxu0
    %v510 = vlaneseq
    %v511 = vshrl.u32 %v510, 7
    %v512 = vsub.s32 5, %v511
    %v513 = vrot.slane %v16, %v512
    %515 = vrot.lane.b32.xlu0 %v513, 32
    %v516 = vpop.permute.xlu0 %515
    %vm518 = vcmask 261120
    %v520 = vsel %vm518, %v259, 0
    %v523 = vsel %vm518, %v264, 0
    %v526 = vsel %vm518, %v340, 0
    %v529 = vsel %vm518, %v345, 0
    %v532 = vsel %vm518, %v421, 0
    %v535 = vsel %vm518, %v426, 0
    %v538 = vsel %vm518, %v502, 0
    %v541 = vsel %vm518, %v507, 0
    %543 = vmatprep.subr.mxu0 0.0
    %544 = vmatpush1.msra.mxu0 %v15
    %545 = vmatprep.subr.mxu0 0.0
    %546 = vmatpush1.msra.mxu0 %v16
    %547 = vmatprep.subr.mxu0 0.0
    %548 = vmatpush1.msra.mxu0 %v17
    %549 = vmatprep.subr.mxu0 0.0
    %550 = vmatpush1.msra.mxu0 %v18
    %551 = vmatprep.subr.mxu0 0.0
    %552 = vmatpush1.msra.mxu0 0.0
    %553 = vmatprep.subr.mxu0 0.0
    %554 = vmatpush1.msra.mxu0 0.0
    %555 = vmatprep.subr.mxu0 0.0
    %556 = vmatpush1.msra.mxu0 0.0
    %557 = vmatprep.subr.mxu0 0.0
    %558 = vmatpush1.msra.mxu0 0.0
    %559 = vmatprep.subr.mxu0 0.0
    %560 = vmatpush1.msra.mxu0 0.0
    %561 = vmatprep.subr.mxu0 0.0
    %562 = vmatpush1.msra.mxu0 0.0
    %563 = vmatprep.subr.mxu0 0.0
    %564 = vmatpush1.msra.mxu0 0.0
    %565 = vmatprep.subr.mxu0 0.0
    %566 = vmatpush1.msra.mxu0 0.0
    %567 = vmatprep.subr.mxu0 0.0
    %568 = vmatpush1.msra.mxu0 0.0
    %569 = vmatprep.subr.mxu0 0.0
    %570 = vmatpush1.msra.mxu0 0.0
    %571 = vmatprep.subr.mxu0 0.0
    %572 = vmatpush1.msra.mxu0 0.0
    %573 = vmatprep.subr.mxu0 0.0
    %574 = vmatpush1.msra.mxu0 0.0
    %575 = vmatprep.subr.mxu0 0.0
    %576 = vmatpush1.msra.mxu0 0.0
    %577 = vmatprep.subr.mxu0 0.0
    %578 = vmatpush1.msra.mxu0 0.0
    %579 = vmatprep.subr.mxu0 0.0
    %580 = vmatpush1.msra.mxu0 0.0
    %581 = vmatprep.subr.mxu0 0.0
    %582 = vmatpush1.msra.mxu0 0.0
    %583 = vmatprep.subr.mxu0 0.0
    %584 = vmatpush1.msra.mxu0 0.0
    %585 = vmatprep.subr.mxu0 0.0
    %586 = vmatpush1.msra.mxu0 0.0
    %587 = vmatprep.subr.mxu0 0.0
    %588 = vmatpush1.msra.mxu0 0.0
    %589 = vmatprep.subr.mxu0 0.0
    %590 = vmatpush1.msra.mxu0 0.0
    %591 = vmatprep.subr.mxu0 0.0
    %592 = vmatpush1.msra.mxu0 0.0
    %593 = vmatprep.subr.mxu0 0.0
    %594 = vmatpush1.msra.mxu0 0.0
    %595 = vmatprep.subr.mxu0 0.0
    %596 = vmatpush1.msra.mxu0 0.0
    %597 = vmatprep.subr.mxu0 0.0
    %598 = vmatpush1.msra.mxu0 0.0
    %599 = vmatprep.subr.mxu0 0.0
    %600 = vmatpush1.msra.mxu0 0.0
    %601 = vmatprep.subr.mxu0 0.0
    %602 = vmatpush1.msra.mxu0 0.0
    %603 = vmatprep.subr.mxu0 0.0
    %604 = vmatpush1.msra.mxu0 0.0
    %605 = vmatprep.subr.mxu0 0.0
    %606 = vmatpush1.msra.mxu0 0.0
    %607 = vmatprep.mubr.f32.mxu0 0.0
    %608 = vmatmul.mubr.f32.gmra.mrb[0].mxu0 %v520
    %v609 = vpop.f32.mrb[0].mxu0
    %v610 = vadd.f32 %v516, %v609
    %v611 = vpop.f32.mrb[0].mxu0
    %612 = vmatprep.mubr.f32.mxu0 0.0
    %613 = vmatmul.mubr.f32.gmra.mrb[0].mxu0 %v523
    %v614 = vpop.f32.mrb[0].mxu0
    %v615 = vadd.f32 %v516, %v614
    %v616 = vpop.f32.mrb[0].mxu0
    %617 = vmatprep.mubr.f32.mxu0 0.0
    %618 = vmatmul.mubr.f32.gmra.mrb[0].mxu0 %v526
    %v619 = vpop.f32.mrb[0].mxu0
    %v620 = vadd.f32 %v516, %v619
    %v621 = vpop.f32.mrb[0].mxu0
    %622 = vmatprep.mubr.f32.mxu0 0.0
    %623 = vmatmul.mubr.f32.gmra.mrb[0].mxu0 %v529
    %v624 = vpop.f32.mrb[0].mxu0
    %v625 = vadd.f32 %v516, %v624
    %v626 = vpop.f32.mrb[0].mxu0
    %627 = vmatprep.mubr.f32.mxu0 0.0
    %628 = vmatmul.mubr.f32.gmra.mrb[0].mxu0 %v532
    %v629 = vpop.f32.mrb[0].mxu0
    %v630 = vadd.f32 %v516, %v629
    %v631 = vpop.f32.mrb[0].mxu0
    %632 = vmatprep.mubr.f32.mxu0 0.0
    %633 = vmatmul.mubr.f32.gmra.mrb[0].mxu0 %v535
    %v634 = vpop.f32.mrb[0].mxu0
    %v635 = vadd.f32 %v516, %v634
    %v636 = vpop.f32.mrb[0].mxu0
    %637 = vmatprep.mubr.f32.mxu0 0.0
    %638 = vmatmul.mubr.f32.gmra.mrb[0].mxu0 %v538
    %v639 = vpop.f32.mrb[0].mxu0
    %v640 = vadd.f32 %v516, %v639
    %v641 = vpop.f32.mrb[0].mxu0
    %642 = vmatprep.mubr.f32.mxu0 0.0
    %643 = vmatmul.mubr.f32.gmra.mrb[0].mxu0 %v541
    %v644 = vpop.f32.mrb[0].mxu0
    %v645 = vadd.f32 %v516, %v644
    %v646 = vpop.f32.mrb[0].mxu0
    %647 = vdwg.mxu0
    %v648 = vmax.f32 %v610, 0.0
    %v649 = vmax.f32 %v615, 0.0
    %v650 = vmax.f32 %v620, 0.0
    %v651 = vmax.f32 %v625, 0.0
    %v652 = vmax.f32 %v630, 0.0
    %v653 = vmax.f32 %v635, 0.0
    %v654 = vmax.f32 %v640, 0.0
    %v655 = vmax.f32 %v645, 0.0
    %656 = vmatprep.subr.mxu0 0.0
    %657 = vmatpush1.msra.mxu0 %v648
    %658 = vmatprep.subr.mxu0 0.0
    %659 = vmatpush1.msra.mxu0 %v649
    %660 = vmatprep.subr.mxu0 0.0
    %661 = vmatpush1.msra.mxu0 0.0
    %662 = vmatprep.subr.mxu0 0.0
    %663 = vmatpush1.msra.mxu0 0.0
    %664 = vmatprep.subr.mxu0 0.0
    %665 = vmatpush1.msra.mxu0 0.0
    %666 = vmatprep.subr.mxu0 0.0
    %667 = vmatpush1.msra.mxu0 0.0
    %668 = vmatprep.subr.mxu0 0.0
    %669 = vmatpush1.msra.mxu0 0.0
    %670 = vmatprep.subr.mxu0 0.0
    %671 = vmatpush1.msra.mxu0 0.0
    %672 = vmatprep.subr.mxu0 0.0
    %673 = vmatpush1.msra.mxu0 0.0
    %674 = vmatprep.subr.mxu0 0.0
    %675 = vmatpush1.msra.mxu0 0.0
    %676 = vmatprep.subr.mxu0 0.0
    %677 = vmatpush1.msra.mxu0 0.0
    %678 = vmatprep.subr.mxu0 0.0
    %679 = vmatpush1.msra.mxu0 0.0
    %680 = vmatprep.subr.mxu0 0.0
    %681 = vmatpush1.msra.mxu0 0.0
    %682 = vmatprep.subr.mxu0 0.0
    %683 = vmatpush1.msra.mxu0 0.0
    %684 = vmatprep.subr.mxu0 0.0
    %685 = vmatpush1.msra.mxu0 0.0
    %686 = vmatprep.subr.mxu0 0.0
    %687 = vmatpush1.msra.mxu0 0.0
    %688 = vmatprep.subr.mxu0 0.0
    %689 = vmatpush1.msra.mxu0 0.0
    %690 = vmatprep.subr.mxu0 0.0
    %691 = vmatpush1.msra.mxu0 0.0
    %692 = vmatprep.subr.mxu0 0.0
    %693 = vmatpush1.msra.mxu0 0.0
    %694 = vmatprep.subr.mxu0 0.0
    %695 = vmatpush1.msra.mxu0 0.0
    %696 = vmatprep.subr.mxu0 0.0
    %697 = vmatpush1.msra.mxu0 0.0
    %698 = vmatprep.subr.mxu0 0.0
    %699 = vmatpush1.msra.mxu0 0.0
    %700 = vmatprep.subr.mxu0 0.0
    %701 = vmatpush1.msra.mxu0 0.0
    %702 = vmatprep.subr.mxu0 0.0
    %703 = vmatpush1.msra.mxu0 0.0
    %704 = vmatprep.subr.mxu0 0.0
    %705 = vmatpush1.msra.mxu0 0.0
    %706 = vmatprep.subr.mxu0 0.0
    %707 = vmatpush1.msra.mxu0 0.0
    %708 = vmatprep.subr.mxu0 0.0
    %709 = vmatpush1.msra.mxu0 0.0
    %710 = vmatprep.subr.mxu0 0.0
    %711 = vmatpush1.msra.mxu0 0.0
    %712 = vmatprep.subr.mxu0 0.0
    %713 = vmatpush1.msra.mxu0 0.0
    %714 = vmatprep.subr.mxu0 0.0
    %715 = vmatpush1.msra.mxu0 0.0
    %716 = vmatprep.subr.mxu0 0.0
    %717 = vmatpush1.msra.mxu0 0.0
    %718 = vmatprep.subr.mxu0 0.0
    %719 = vmatpush1.msra.mxu0 0.0
    %720 = vmatprep.mubr.f32.mxu0 0.0
    %721 = vmatmul.mubr.f32.gmra.mrb[0].mxu0 %v187
    %v722 = vpop.f32.mrb[0].mxu0
    %v723 = vadd.f32 0.0, %v722
    %v724 = vpop.f32.mrb[0].mxu0
    %725 = vmatprep.mubr.f32.mxu0 0.0
    %726 = vmatmul.mubr.f32.gmra.mrb[0].mxu0 %v190
    %v727 = vpop.f32.mrb[0].mxu0
    %v728 = vadd.f32 0.0, %v727
    %v729 = vpop.f32.mrb[0].mxu0
    %730 = vdwg.mxu0
    %731 = vmatprep.subr.mxu0 0.0
    %732 = vmatpush1.msra.mxu0 %v650
    %733 = vmatprep.subr.mxu0 0.0
    %734 = vmatpush1.msra.mxu0 %v651
    %735 = vmatprep.subr.mxu0 0.0
    %736 = vmatpush1.msra.mxu0 0.0
    %737 = vmatprep.subr.mxu0 0.0
    %738 = vmatpush1.msra.mxu0 0.0
    %739 = vmatprep.subr.mxu0 0.0
    %740 = vmatpush1.msra.mxu0 0.0
    %741 = vmatprep.subr.mxu0 0.0
    %742 = vmatpush1.msra.mxu0 0.0
    %743 = vmatprep.subr.mxu0 0.0
    %744 = vmatpush1.msra.mxu0 0.0
    %745 = vmatprep.subr.mxu0 0.0
    %746 = vmatpush1.msra.mxu0 0.0
    %747 = vmatprep.subr.mxu0 0.0
    %748 = vmatpush1.msra.mxu0 0.0
    %749 = vmatprep.subr.mxu0 0.0
    %750 = vmatpush1.msra.mxu0 0.0
    %751 = vmatprep.subr.mxu0 0.0
    %752 = vmatpush1.msra.mxu0 0.0
    %753 = vmatprep.subr.mxu0 0.0
    %754 = vmatpush1.msra.mxu0 0.0
    %755 = vmatprep.subr.mxu0 0.0
    %756 = vmatpush1.msra.mxu0 0.0
    %757 = vmatprep.subr.mxu0 0.0
    %758 = vmatpush1.msra.mxu0 0.0
    %759 = vmatprep.subr.mxu0 0.0
    %760 = vmatpush1.msra.mxu0 0.0
    %761 = vmatprep.subr.mxu0 0.0
    %762 = vmatpush1.msra.mxu0 0.0
    %763 = vmatprep.subr.mxu0 0.0
    %764 = vmatpush1.msra.mxu0 0.0
    %765 = vmatprep.subr.mxu0 0.0
    %766 = vmatpush1.msra.mxu0 0.0
    %767 = vmatprep.subr.mxu0 0.0
    %768 = vmatpush1.msra.mxu0 0.0
    %769 = vmatprep.subr.mxu0 0.0
    %770 = vmatpush1.msra.mxu0 0.0
    %771 = vmatprep.subr.mxu0 0.0
    %772 = vmatpush1.msra.mxu0 0.0
    %773 = vmatprep.subr.mxu0 0.0
    %774 = vmatpush1.msra.mxu0 0.0
    %775 = vmatprep.subr.mxu0 0.0
    %776 = vmatpush1.msra.mxu0 0.0
    %777 = vmatprep.subr.mxu0 0.0
    %778 = vmatpush1.msra.mxu0 0.0
    %779 = vmatprep.subr.mxu0 0.0
    %780 = vmatpush1.msra.mxu0 0.0
    %781 = vmatprep.subr.mxu0 0.0
    %782 = vmatpush1.msra.mxu0 0.0
    %783 = vmatprep.subr.mxu0 0.0
    %784 = vmatpush1.msra.mxu0 0.0
    %785 = vmatprep.subr.mxu0 0.0
    %786 = vmatpush1.msra.mxu0 0.0
    %787 = vmatprep.subr.mxu0 0.0
    %788 = vmatpush1.msra.mxu0 0.0
    %789 = vmatprep.subr.mxu0 0.0
    %790 = vmatpush1.msra.mxu0 0.0
    %791 = vmatprep.subr.mxu0 0.0
    %792 = vmatpush1.msra.mxu0 0.0
    %793 = vmatprep.subr.mxu0 0.0
    %794 = vmatpush1.msra.mxu0 0.0
    %795 = vmatprep.mubr.f32.mxu0 0.0
    %796 = vmatmul.mubr.f32.gmra.mrb[0].mxu0 %v268
    %v797 = vpop.f32.mrb[0].mxu0
    %v798 = vadd.f32 0.0, %v797
    %v799 = vpop.f32.mrb[0].mxu0
    %800 = vmatprep.mubr.f32.mxu0 0.0
    %801 = vmatmul.mubr.f32.gmra.mrb[0].mxu0 %v271
    %v802 = vpop.f32.mrb[0].mxu0
    %v803 = vadd.f32 0.0, %v802
    %v804 = vpop.f32.mrb[0].mxu0
    %805 = vdwg.mxu0
    %806 = vmatprep.subr.mxu0 0.0
    %807 = vmatpush1.msra.mxu0 %v652
    %808 = vmatprep.subr.mxu0 0.0
    %809 = vmatpush1.msra.mxu0 %v653
    %810 = vmatprep.subr.mxu0 0.0
    %811 = vmatpush1.msra.mxu0 0.0
    %812 = vmatprep.subr.mxu0 0.0
    %813 = vmatpush1.msra.mxu0 0.0
    %814 = vmatprep.subr.mxu0 0.0
    %815 = vmatpush1.msra.mxu0 0.0
    %816 = vmatprep.subr.mxu0 0.0
    %817 = vmatpush1.msra.mxu0 0.0
    %818 = vmatprep.subr.mxu0 0.0
    %819 = vmatpush1.msra.mxu0 0.0
    %820 = vmatprep.subr.mxu0 0.0
    %821 = vmatpush1.msra.mxu0 0.0
    %822 = vmatprep.subr.mxu0 0.0
    %823 = vmatpush1.msra.mxu0 0.0
    %824 = vmatprep.subr.mxu0 0.0
    %825 = vmatpush1.msra.mxu0 0.0
    %826 = vmatprep.subr.mxu0 0.0
    %827 = vmatpush1.msra.mxu0 0.0
    %828 = vmatprep.subr.mxu0 0.0
    %829 = vmatpush1.msra.mxu0 0.0
    %830 = vmatprep.subr.mxu0 0.0
    %831 = vmatpush1.msra.mxu0 0.0
    %832 = vmatprep.subr.mxu0 0.0
    %833 = vmatpush1.msra.mxu0 0.0
    %834 = vmatprep.subr.mxu0 0.0
    %835 = vmatpush1.msra.mxu0 0.0
    %836 = vmatprep.subr.mxu0 0.0
    %837 = vmatpush1.msra.mxu0 0.0
    %838 = vmatprep.subr.mxu0 0.0
    %839 = vmatpush1.msra.mxu0 0.0
    %840 = vmatprep.subr.mxu0 0.0
    %841 = vmatpush1.msra.mxu0 0.0
    %842 = vmatprep.subr.mxu0 0.0
    %843 = vmatpush1.msra.mxu0 0.0
    %844 = vmatprep.subr.mxu0 0.0
    %845 = vmatpush1.msra.mxu0 0.0
    %846 = vmatprep.subr.mxu0 0.0
    %847 = vmatpush1.msra.mxu0 0.0
    %848 = vmatprep.subr.mxu0 0.0
    %849 = vmatpush1.msra.mxu0 0.0
    %850 = vmatprep.subr.mxu0 0.0
    %851 = vmatpush1.msra.mxu0 0.0
    %852 = vmatprep.subr.mxu0 0.0
    %853 = vmatpush1.msra.mxu0 0.0
    %854 = vmatprep.subr.mxu0 0.0
    %855 = vmatpush1.msra.mxu0 0.0
    %856 = vmatprep.subr.mxu0 0.0
    %857 = vmatpush1.msra.mxu0 0.0
    %858 = vmatprep.subr.mxu0 0.0
    %859 = vmatpush1.msra.mxu0 0.0
    %860 = vmatprep.subr.mxu0 0.0
    %861 = vmatpush1.msra.mxu0 0.0
    %862 = vmatprep.subr.mxu0 0.0
    %863 = vmatpush1.msra.mxu0 0.0
    %864 = vmatprep.subr.mxu0 0.0
    %865 = vmatpush1.msra.mxu0 0.0
    %866 = vmatprep.subr.mxu0 0.0
    %867 = vmatpush1.msra.mxu0 0.0
    %868 = vmatprep.subr.mxu0 0.0
    %869 = vmatpush1.msra.mxu0 0.0
    %870 = vmatprep.mubr.f32.mxu0 0.0
    %871 = vmatmul.mubr.f32.gmra.mrb[0].mxu0 %v349
    %v872 = vpop.f32.mrb[0].mxu0
    %v873 = vadd.f32 0.0, %v872
    %v874 = vpop.f32.mrb[0].mxu0
    %875 = vmatprep.mubr.f32.mxu0 0.0
    %876 = vmatmul.mubr.f32.gmra.mrb[0].mxu0 %v352
    %v877 = vpop.f32.mrb[0].mxu0
    %v878 = vadd.f32 0.0, %v877
    %v879 = vpop.f32.mrb[0].mxu0
    %880 = vdwg.mxu0
    %881 = vmatprep.subr.mxu0 0.0
    %882 = vmatpush1.msra.mxu0 %v654
    %883 = vmatprep.subr.mxu0 0.0
    %884 = vmatpush1.msra.mxu0 %v655
    %885 = vmatprep.subr.mxu0 0.0
    %886 = vmatpush1.msra.mxu0 0.0
    %887 = vmatprep.subr.mxu0 0.0
    %888 = vmatpush1.msra.mxu0 0.0
    %889 = vmatprep.subr.mxu0 0.0
    %890 = vmatpush1.msra.mxu0 0.0
    %891 = vmatprep.subr.mxu0 0.0
    %892 = vmatpush1.msra.mxu0 0.0
    %893 = vmatprep.subr.mxu0 0.0
    %894 = vmatpush1.msra.mxu0 0.0
    %895 = vmatprep.subr.mxu0 0.0
    %896 = vmatpush1.msra.mxu0 0.0
    %897 = vmatprep.subr.mxu0 0.0
    %898 = vmatpush1.msra.mxu0 0.0
    %899 = vmatprep.subr.mxu0 0.0
    %900 = vmatpush1.msra.mxu0 0.0
    %901 = vmatprep.subr.mxu0 0.0
    %902 = vmatpush1.msra.mxu0 0.0
    %903 = vmatprep.subr.mxu0 0.0
    %904 = vmatpush1.msra.mxu0 0.0
    %905 = vmatprep.subr.mxu0 0.0
    %906 = vmatpush1.msra.mxu0 0.0
    %907 = vmatprep.subr.mxu0 0.0
    %908 = vmatpush1.msra.mxu0 0.0
    %909 = vmatprep.subr.mxu0 0.0
    %910 = vmatpush1.msra.mxu0 0.0
    %911 = vmatprep.subr.mxu0 0.0
    %912 = vmatpush1.msra.mxu0 0.0
    %913 = vmatprep.subr.mxu0 0.0
    %914 = vmatpush1.msra.mxu0 0.0
    %915 = vmatprep.subr.mxu0 0.0
    %916 = vmatpush1.msra.mxu0 0.0
    %917 = vmatprep.subr.mxu0 0.0
    %918 = vmatpush1.msra.mxu0 0.0
    %919 = vmatprep.subr.mxu0 0.0
    %920 = vmatpush1.msra.mxu0 0.0
    %921 = vmatprep.subr.mxu0 0.0
    %922 = vmatpush1.msra.mxu0 0.0
    %923 = vmatprep.subr.mxu0 0.0
    %924 = vmatpush1.msra.mxu0 0.0
    %925 = vmatprep.subr.mxu0 0.0
    %926 = vmatpush1.msra.mxu0 0.0
    %927 = vmatprep.subr.mxu0 0.0
    %928 = vmatpush1.msra.mxu0 0.0
    %929 = vmatprep.subr.mxu0 0.0
    %930 = vmatpush1.msra.mxu0 0.0
    %931 = vmatprep.subr.mxu0 0.0
    %932 = vmatpush1.msra.mxu0 0.0
    %933 = vmatprep.subr.mxu0 0.0
    %934 = vmatpush1.msra.mxu0 0.0
    %935 = vmatprep.subr.mxu0 0.0
    %936 = vmatpush1.msra.mxu0 0.0
    %937 = vmatprep.subr.mxu0 0.0
    %938 = vmatpush1.msra.mxu0 0.0
    %939 = vmatprep.subr.mxu0 0.0
    %940 = vmatpush1.msra.mxu0 0.0
    %941 = vmatprep.subr.mxu0 0.0
    %942 = vmatpush1.msra.mxu0 0.0
    %943 = vmatprep.subr.mxu0 0.0
    %944 = vmatpush1.msra.mxu0 0.0
    %945 = vmatprep.mubr.f32.mxu0 0.0
    %946 = vmatmul.mubr.f32.gmra.mrb[0].mxu0 %v430
    %v947 = vpop.f32.mrb[0].mxu0
    %v948 = vadd.f32 0.0, %v947
    %v949 = vpop.f32.mrb[0].mxu0
    %950 = vmatprep.mubr.f32.mxu0 0.0
    %951 = vmatmul.mubr.f32.gmra.mrb[0].mxu0 %v433
    %v952 = vpop.f32.mrb[0].mxu0
    %v953 = vadd.f32 0.0, %v952
    %v954 = vpop.f32.mrb[0].mxu0
    %955 = vdwg.mxu0
    %v956 = vlaneseq
    %v957 = vshrl.u32 %v956, 7
    %v958 = vsub.s32 6, %v957
    %v959 = vrot.slane %v16, %v958
    %963 = vrot.lane.b32.xlu0 %v15, 96
    %v964 = vpop.permute.xlu0 %963
    %965 = vrot.lane.b32.xlu0 %v16, 96
    %v966 = vpop.permute.xlu0 %965
    %967 = vrot.lane.b32.xlu0 %v17, 96
    %v968 = vpop.permute.xlu0 %967
    %969 = vrot.lane.b32.xlu0 %v18, 96
    %v970 = vpop.permute.xlu0 %969
    %976 = vrot.lane.b32.xlu0 %v959, 32
    %v977 = vpop.permute.xlu0 %976
    %v980 = vsel %vm518, %v723, 0
    %v983 = vsel %vm518, %v728, 0
    %v986 = vsel %vm518, %v798, 0
    %v989 = vsel %vm518, %v803, 0
    %v992 = vsel %vm518, %v873, 0
    %v995 = vsel %vm518, %v878, 0
    %v998 = vsel %vm518, %v948, 0
    %v1001 = vsel %vm518, %v953, 0
    %1003 = vmatprep.subr.mxu0 0.0
    %1004 = vmatpush1.msra.mxu0 %v964
    %1005 = vmatprep.subr.mxu0 0.0
    %1006 = vmatpush1.msra.mxu0 %v966
    %1007 = vmatprep.subr.mxu0 0.0
    %1008 = vmatpush1.msra.mxu0 %v968
    %1009 = vmatprep.subr.mxu0 0.0
    %1010 = vmatpush1.msra.mxu0 %v970
    %1011 = vmatprep.subr.mxu0 0.0
    %1012 = vmatpush1.msra.mxu0 0.0
    %1013 = vmatprep.subr.mxu0 0.0
    %1014 = vmatpush1.msra.mxu0 0.0
    %1015 = vmatprep.subr.mxu0 0.0
    %1016 = vmatpush1.msra.mxu0 0.0
    %1017 = vmatprep.subr.mxu0 0.0
    %1018 = vmatpush1.msra.mxu0 0.0
    %1019 = vmatprep.subr.mxu0 0.0
    %1020 = vmatpush1.msra.mxu0 0.0
    %1021 = vmatprep.subr.mxu0 0.0
    %1022 = vmatpush1.msra.mxu0 0.0
    %1023 = vmatprep.subr.mxu0 0.0
    %1024 = vmatpush1.msra.mxu0 0.0
    %1025 = vmatprep.subr.mxu0 0.0
    %1026 = vmatpush1.msra.mxu0 0.0
    %1027 = vmatprep.subr.mxu0 0.0
    %1028 = vmatpush1.msra.mxu0 0.0
    %1029 = vmatprep.subr.mxu0 0.0
    %1030 = vmatpush1.msra.mxu0 0.0
    %1031 = vmatprep.subr.mxu0 0.0
    %1032 = vmatpush1.msra.mxu0 0.0
    %1033 = vmatprep.subr.mxu0 0.0
    %1034 = vmatpush1.msra.mxu0 0.0
    %1035 = vmatprep.subr.mxu0 0.0
    %1036 = vmatpush1.msra.mxu0 0.0
    %1037 = vmatprep.subr.mxu0 0.0
    %1038 = vmatpush1.msra.mxu0 0.0
    %1039 = vmatprep.subr.mxu0 0.0
    %1040 = vmatpush1.msra.mxu0 0.0
    %1041 = vmatprep.subr.mxu0 0.0
    %1042 = vmatpush1.msra.mxu0 0.0
    %1043 = vmatprep.subr.mxu0 0.0
    %1044 = vmatpush1.msra.mxu0 0.0
    %1045 = vmatprep.subr.mxu0 0.0
    %1046 = vmatpush1.msra.mxu0 0.0
    %1047 = vmatprep.subr.mxu0 0.0
    %1048 = vmatpush1.msra.mxu0 0.0
    %1049 = vmatprep.subr.mxu0 0.0
    %1050 = vmatpush1.msra.mxu0 0.0
    %1051 = vmatprep.subr.mxu0 0.0
    %1052 = vmatpush1.msra.mxu0 0.0
    %1053 = vmatprep.subr.mxu0 0.0
    %1054 = vmatpush1.msra.mxu0 0.0
    %1055 = vmatprep.subr.mxu0 0.0
    %1056 = vmatpush1.msra.mxu0 0.0
    %1057 = vmatprep.subr.mxu0 0.0
    %1058 = vmatpush1.msra.mxu0 0.0
    %1059 = vmatprep.subr.mxu0 0.0
    %1060 = vmatpush1.msra.mxu0 0.0
    %1061 = vmatprep.subr.mxu0 0.0
    %1062 = vmatpush1.msra.mxu0 0.0
    %1063 = vmatprep.subr.mxu0 0.0
    %1064 = vmatpush1.msra.mxu0 0.0
    %1065 = vmatprep.subr.mxu0 0.0
    %1066 = vmatpush1.msra.mxu0 0.0
    %1067 = vmatprep.mubr.f32.mxu0 0.0
    %1068 = vmatmul.mubr.f32.gmra.mrb[0].mxu0 %v980
    %v1069 = vpop.f32.mrb[0].mxu0
    %v1070 = vadd.f32 %v977, %v1069
    %v1071 = vpop.f32.mrb[0].mxu0
    %1072 = vmatprep.mubr.f32.mxu0 0.0
    %1073 = vmatmul.mubr.f32.gmra.mrb[0].mxu0 %v983
    %v1074 = vpop.f32.mrb[0].mxu0
    %v1075 = vadd.f32 %v977, %v1074
    %v1076 = vpop.f32.mrb[0].mxu0
    %1077 = vmatprep.mubr.f32.mxu0 0.0
    %1078 = vmatmul.mubr.f32.gmra.mrb[0].mxu0 %v986
    %v1079 = vpop.f32.mrb[0].mxu0
    %v1080 = vadd.f32 %v977, %v1079
    %v1081 = vpop.f32.mrb[0].mxu0
    %1082 = vmatprep.mubr.f32.mxu0 0.0
    %1083 = vmatmul.mubr.f32.gmra.mrb[0].mxu0 %v989
    %v1084 = vpop.f32.mrb[0].mxu0
    %v1085 = vadd.f32 %v977, %v1084
    %v1086 = vpop.f32.mrb[0].mxu0
    %1087 = vmatprep.mubr.f32.mxu0 0.0
    %1088 = vmatmul.mubr.f32.gmra.mrb[0].mxu0 %v992
    %v1089 = vpop.f32.mrb[0].mxu0
    %v1090 = vadd.f32 %v977, %v1089
    %v1091 = vpop.f32.mrb[0].mxu0
    %1092 = vmatprep.mubr.f32.mxu0 0.0
    %1093 = vmatmul.mubr.f32.gmra.mrb[0].mxu0 %v995
    %v1094 = vpop.f32.mrb[0].mxu0
    %v1095 = vadd.f32 %v977, %v1094
    %v1096 = vpop.f32.mrb[0].mxu0
    %1097 = vmatprep.mubr.f32.mxu0 0.0
    %1098 = vmatmul.mubr.f32.gmra.mrb[0].mxu0 %v998
    %v1099 = vpop.f32.mrb[0].mxu0
    %v1100 = vadd.f32 %v977, %v1099
    %v1101 = vpop.f32.mrb[0].mxu0
    %1102 = vmatprep.mubr.f32.mxu0 0.0
    %1103 = vmatmul.mubr.f32.gmra.mrb[0].mxu0 %v1001
    %v1104 = vpop.f32.mrb[0].mxu0
    %v1105 = vadd.f32 %v977, %v1104
    %v1106 = vpop.f32.mrb[0].mxu0
    %1107 = vdwg.mxu0
    %v1108 = vmax.f32 %v1070, 0.0
    %v1109 = vmax.f32 %v1075, 0.0
    %v1110 = vmax.f32 %v1080, 0.0
    %v1111 = vmax.f32 %v1085, 0.0
    %v1112 = vmax.f32 %v1090, 0.0
    %v1113 = vmax.f32 %v1095, 0.0
    %v1114 = vmax.f32 %v1100, 0.0
    %v1115 = vmax.f32 %v1105, 0.0
    %1116 = vmatprep.subr.mxu0 0.0
    %1117 = vmatpush1.msra.mxu0 %v1108
    %1118 = vmatprep.subr.mxu0 0.0
    %1119 = vmatpush1.msra.mxu0 %v1109
    %1120 = vmatprep.subr.mxu0 0.0
    %1121 = vmatpush1.msra.mxu0 0.0
    %1122 = vmatprep.subr.mxu0 0.0
    %1123 = vmatpush1.msra.mxu0 0.0
    %1124 = vmatprep.subr.mxu0 0.0
    %1125 = vmatpush1.msra.mxu0 0.0
    %1126 = vmatprep.subr.mxu0 0.0
    %1127 = vmatpush1.msra.mxu0 0.0
    %1128 = vmatprep.subr.mxu0 0.0
    %1129 = vmatpush1.msra.mxu0 0.0
    %1130 = vmatprep.subr.mxu0 0.0
    %1131 = vmatpush1.msra.mxu0 0.0
    %1132 = vmatprep.subr.mxu0 0.0
    %1133 = vmatpush1.msra.mxu0 0.0
    %1134 = vmatprep.subr.mxu0 0.0
    %1135 = vmatpush1.msra.mxu0 0.0
    %1136 = vmatprep.subr.mxu0 0.0
    %1137 = vmatpush1.msra.mxu0 0.0
    %1138 = vmatprep.subr.mxu0 0.0
    %1139 = vmatpush1.msra.mxu0 0.0
    %1140 = vmatprep.subr.mxu0 0.0
    %1141 = vmatpush1.msra.mxu0 0.0
    %1142 = vmatprep.subr.mxu0 0.0
    %1143 = vmatpush1.msra.mxu0 0.0
    %1144 = vmatprep.subr.mxu0 0.0
    %1145 = vmatpush1.msra.mxu0 0.0
    %1146 = vmatprep.subr.mxu0 0.0
    %1147 = vmatpush1.msra.mxu0 0.0
    %1148 = vmatprep.subr.mxu0 0.0
    %1149 = vmatpush1.msra.mxu0 0.0
    %1150 = vmatprep.subr.mxu0 0.0
    %1151 = vmatpush1.msra.mxu0 0.0
    %1152 = vmatprep.subr.mxu0 0.0
    %1153 = vmatpush1.msra.mxu0 0.0
    %1154 = vmatprep.subr.mxu0 0.0
    %1155 = vmatpush1.msra.mxu0 0.0
    %1156 = vmatprep.subr.mxu0 0.0
    %1157 = vmatpush1.msra.mxu0 0.0
    %1158 = vmatprep.subr.mxu0 0.0
    %1159 = vmatpush1.msra.mxu0 0.0
    %1160 = vmatprep.subr.mxu0 0.0
    %1161 = vmatpush1.msra.mxu0 0.0
    %1162 = vmatprep.subr.mxu0 0.0
    %1163 = vmatpush1.msra.mxu0 0.0
    %1164 = vmatprep.subr.mxu0 0.0
    %1165 = vmatpush1.msra.mxu0 0.0
    %1166 = vmatprep.subr.mxu0 0.0
    %1167 = vmatpush1.msra.mxu0 0.0
    %1168 = vmatprep.subr.mxu0 0.0
    %1169 = vmatpush1.msra.mxu0 0.0
    %1170 = vmatprep.subr.mxu0 0.0
    %1171 = vmatpush1.msra.mxu0 0.0
    %1172 = vmatprep.subr.mxu0 0.0
    %1173 = vmatpush1.msra.mxu0 0.0
    %1174 = vmatprep.subr.mxu0 0.0
    %1175 = vmatpush1.msra.mxu0 0.0
    %1176 = vmatprep.subr.mxu0 0.0
    %1177 = vmatpush1.msra.mxu0 0.0
    %1178 = vmatprep.subr.mxu0 0.0
    %1179 = vmatpush1.msra.mxu0 0.0
    %1180 = vmatprep.mubr.f32.mxu0 0.0
    %1181 = vmatmul.mubr.f32.gmra.mrb[0].mxu0 %v187
    %v1182 = vpop.f32.mrb[0].mxu0
    %v1183 = vadd.f32 0.0, %v1182
    %v1184 = vpop.f32.mrb[0].mxu0
    %1185 = vmatprep.mubr.f32.mxu0 0.0
    %1186 = vmatmul.mubr.f32.gmra.mrb[0].mxu0 %v190
    %v1187 = vpop.f32.mrb[0].mxu0
    %v1188 = vadd.f32 0.0, %v1187
    %v1189 = vpop.f32.mrb[0].mxu0
    %1190 = vdwg.mxu0
    %1191 = vmatprep.subr.mxu0 0.0
    %1192 = vmatpush1.msra.mxu0 %v1110
    %1193 = vmatprep.subr.mxu0 0.0
    %1194 = vmatpush1.msra.mxu0 %v1111
    %1195 = vmatprep.subr.mxu0 0.0
    %1196 = vmatpush1.msra.mxu0 0.0
    %1197 = vmatprep.subr.mxu0 0.0
    %1198 = vmatpush1.msra.mxu0 0.0
    %1199 = vmatprep.subr.mxu0 0.0
    %1200 = vmatpush1.msra.mxu0 0.0
    %1201 = vmatprep.subr.mxu0 0.0
    %1202 = vmatpush1.msra.mxu0 0.0
    %1203 = vmatprep.subr.mxu0 0.0
    %1204 = vmatpush1.msra.mxu0 0.0
    %1205 = vmatprep.subr.mxu0 0.0
    %1206 = vmatpush1.msra.mxu0 0.0
    %1207 = vmatprep.subr.mxu0 0.0
    %1208 = vmatpush1.msra.mxu0 0.0
    %1209 = vmatprep.subr.mxu0 0.0
    %1210 = vmatpush1.msra.mxu0 0.0
    %1211 = vmatprep.subr.mxu0 0.0
    %1212 = vmatpush1.msra.mxu0 0.0
    %1213 = vmatprep.subr.mxu0 0.0
    %1214 = vmatpush1.msra.mxu0 0.0
    %1215 = vmatprep.subr.mxu0 0.0
    %1216 = vmatpush1.msra.mxu0 0.0
    %1217 = vmatprep.subr.mxu0 0.0
    %1218 = vmatpush1.msra.mxu0 0.0
    %1219 = vmatprep.subr.mxu0 0.0
    %1220 = vmatpush1.msra.mxu0 0.0
    %1221 = vmatprep.subr.mxu0 0.0
    %1222 = vmatpush1.msra.mxu0 0.0
    %1223 = vmatprep.subr.mxu0 0.0
    %1224 = vmatpush1.msra.mxu0 0.0
    %1225 = vmatprep.subr.mxu0 0.0
    %1226 = vmatpush1.msra.mxu0 0.0
    %1227 = vmatprep.subr.mxu0 0.0
    %1228 = vmatpush1.msra.mxu0 0.0
    %1229 = vmatprep.subr.mxu0 0.0
    %1230 = vmatpush1.msra.mxu0 0.0
    %1231 = vmatprep.subr.mxu0 0.0
    %1232 = vmatpush1.msra.mxu0 0.0
    %1233 = vmatprep.subr.mxu0 0.0
    %1234 = vmatpush1.msra.mxu0 0.0
    %1235 = vmatprep.subr.mxu0 0.0
    %1236 = vmatpush1.msra.mxu0 0.0
    %1237 = vmatprep.subr.mxu0 0.0
    %1238 = vmatpush1.msra.mxu0 0.0
    %1239 = vmatprep.subr.mxu0 0.0
    %1240 = vmatpush1.msra.mxu0 0.0
    %1241 = vmatprep.subr.mxu0 0.0
    %1242 = vmatpush1.msra.mxu0 0.0
    %1243 = vmatprep.subr.mxu0 0.0
    %1244 = vmatpush1.msra.mxu0 0.0
    %1245 = vmatprep.subr.mxu0 0.0
    %1246 = vmatpush1.msra.mxu0 0.0
    %1247 = vmatprep.subr.mxu0 0.0
    %1248 = vmatpush1.msra.mxu0 0.0
    %1249 = vmatprep.subr.mxu0 0.0
    %1250 = vmatpush1.msra.mxu0 0.0
    %1251 = vmatprep.subr.mxu0 0.0
    %1252 = vmatpush1.msra.mxu0 0.0
    %1253 = vmatprep.subr.mxu0 0.0
    %1254 = vmatpush1.msra.mxu0 0.0
    %1255 = vmatprep.mubr.f32.mxu0 0.0
    %1256 = vmatmul.mubr.f32.gmra.mrb[0].mxu0 %v268
    %v1257 = vpop.f32.mrb[0].mxu0
    %v1258 = vadd.f32 0.0, %v1257
    %v1259 = vpop.f32.mrb[0].mxu0
    %1260 = vmatprep.mubr.f32.mxu0 0.0
    %1261 = vmatmul.mubr.f32.gmra.mrb[0].mxu0 %v271
    %v1262 = vpop.f32.mrb[0].mxu0
    %v1263 = vadd.f32 0.0, %v1262
    %v1264 = vpop.f32.mrb[0].mxu0
    %1265 = vdwg.mxu0
    %1266 = vmatprep.subr.mxu0 0.0
    %1267 = vmatpush1.msra.mxu0 %v1112
    %1268 = vmatprep.subr.mxu0 0.0
    %1269 = vmatpush1.msra.mxu0 %v1113
    %1270 = vmatprep.subr.mxu0 0.0
    %1271 = vmatpush1.msra.mxu0 0.0
    %1272 = vmatprep.subr.mxu0 0.0
    %1273 = vmatpush1.msra.mxu0 0.0
    %1274 = vmatprep.subr.mxu0 0.0
    %1275 = vmatpush1.msra.mxu0 0.0
    %1276 = vmatprep.subr.mxu0 0.0
    %1277 = vmatpush1.msra.mxu0 0.0
    %1278 = vmatprep.subr.mxu0 0.0
    %1279 = vmatpush1.msra.mxu0 0.0
    %1280 = vmatprep.subr.mxu0 0.0
    %1281 = vmatpush1.msra.mxu0 0.0
    %1282 = vmatprep.subr.mxu0 0.0
    %1283 = vmatpush1.msra.mxu0 0.0
    %1284 = vmatprep.subr.mxu0 0.0
    %1285 = vmatpush1.msra.mxu0 0.0
    %1286 = vmatprep.subr.mxu0 0.0
    %1287 = vmatpush1.msra.mxu0 0.0
    %1288 = vmatprep.subr.mxu0 0.0
    %1289 = vmatpush1.msra.mxu0 0.0
    %1290 = vmatprep.subr.mxu0 0.0
    %1291 = vmatpush1.msra.mxu0 0.0
    %1292 = vmatprep.subr.mxu0 0.0
    %1293 = vmatpush1.msra.mxu0 0.0
    %1294 = vmatprep.subr.mxu0 0.0
    %1295 = vmatpush1.msra.mxu0 0.0
    %1296 = vmatprep.subr.mxu0 0.0
    %1297 = vmatpush1.msra.mxu0 0.0
    %1298 = vmatprep.subr.mxu0 0.0
    %1299 = vmatpush1.msra.mxu0 0.0
    %1300 = vmatprep.subr.mxu0 0.0
    %1301 = vmatpush1.msra.mxu0 0.0
    %1302 = vmatprep.subr.mxu0 0.0
    %1303 = vmatpush1.msra.mxu0 0.0
    %1304 = vmatprep.subr.mxu0 0.0
    %1305 = vmatpush1.msra.mxu0 0.0
    %1306 = vmatprep.subr.mxu0 0.0
    %1307 = vmatpush1.msra.mxu0 0.0
    %1308 = vmatprep.subr.mxu0 0.0
    %1309 = vmatpush1.msra.mxu0 0.0
    %1310 = vmatprep.subr.mxu0 0.0
    %1311 = vmatpush1.msra.mxu0 0.0
    %1312 = vmatprep.subr.mxu0 0.0
    %1313 = vmatpush1.msra.mxu0 0.0
    %1314 = vmatprep.subr.mxu0 0.0
    %1315 = vmatpush1.msra.mxu0 0.0
    %1316 = vmatprep.subr.mxu0 0.0
    %1317 = vmatpush1.msra.mxu0 0.0
    %1318 = vmatprep.subr.mxu0 0.0
    %1319 = vmatpush1.msra.mxu0 0.0
    %1320 = vmatprep.subr.mxu0 0.0
    %1321 = vmatpush1.msra.mxu0 0.0
    %1322 = vmatprep.subr.mxu0 0.0
    %1323 = vmatpush1.msra.mxu0 0.0
    %1324 = vmatprep.subr.mxu0 0.0
    %1325 = vmatpush1.msra.mxu0 0.0
    %1326 = vmatprep.subr.mxu0 0.0
    %1327 = vmatpush1.msra.mxu0 0.0
    %1328 = vmatprep.subr.mxu0 0.0
    %1329 = vmatpush1.msra.mxu0 0.0
    %1330 = vmatprep.mubr.f32.mxu0 0.0
    %1331 = vmatmul.mubr.f32.gmra.mrb[0].mxu0 %v349
    %v1332 = vpop.f32.mrb[0].mxu0
    %v1333 = vadd.f32 0.0, %v1332
    %v1334 = vpop.f32.mrb[0].mxu0
    %1335 = vmatprep.mubr.f32.mxu0 0.0
    %1336 = vmatmul.mubr.f32.gmra.mrb[0].mxu0 %v352
    %v1337 = vpop.f32.mrb[0].mxu0
    %v1338 = vadd.f32 0.0, %v1337
    %v1339 = vpop.f32.mrb[0].mxu0
    %1340 = vdwg.mxu0
    %1341 = vmatprep.subr.mxu0 0.0
    %1342 = vmatpush1.msra.mxu0 %v1114
    %1343 = vmatprep.subr.mxu0 0.0
    %1344 = vmatpush1.msra.mxu0 %v1115
    %1345 = vmatprep.subr.mxu0 0.0
    %1346 = vmatpush1.msra.mxu0 0.0
    %1347 = vmatprep.subr.mxu0 0.0
    %1348 = vmatpush1.msra.mxu0 0.0
    %1349 = vmatprep.subr.mxu0 0.0
    %1350 = vmatpush1.msra.mxu0 0.0
    %1351 = vmatprep.subr.mxu0 0.0
    %1352 = vmatpush1.msra.mxu0 0.0
    %1353 = vmatprep.subr.mxu0 0.0
    %1354 = vmatpush1.msra.mxu0 0.0
    %1355 = vmatprep.subr.mxu0 0.0
    %1356 = vmatpush1.msra.mxu0 0.0
    %1357 = vmatprep.subr.mxu0 0.0
    %1358 = vmatpush1.msra.mxu0 0.0
    %1359 = vmatprep.subr.mxu0 0.0
    %1360 = vmatpush1.msra.mxu0 0.0
    %1361 = vmatprep.subr.mxu0 0.0
    %1362 = vmatpush1.msra.mxu0 0.0
    %1363 = vmatprep.subr.mxu0 0.0
    %1364 = vmatpush1.msra.mxu0 0.0
    %1365 = vmatprep.subr.mxu0 0.0
    %1366 = vmatpush1.msra.mxu0 0.0
    %1367 = vmatprep.subr.mxu0 0.0
    %1368 = vmatpush1.msra.mxu0 0.0
    %1369 = vmatprep.subr.mxu0 0.0
    %1370 = vmatpush1.msra.mxu0 0.0
    %1371 = vmatprep.subr.mxu0 0.0
    %1372 = vmatpush1.msra.mxu0 0.0
    %1373 = vmatprep.subr.mxu0 0.0
    %1374 = vmatpush1.msra.mxu0 0.0
    %1375 = vmatprep.subr.mxu0 0.0
    %1376 = vmatpush1.msra.mxu0 0.0
    %1377 = vmatprep.subr.mxu0 0.0
    %1378 = vmatpush1.msra.mxu0 0.0
    %1379 = vmatprep.subr.mxu0 0.0
    %1380 = vmatpush1.msra.mxu0 0.0
    %1381 = vmatprep.subr.mxu0 0.0
    %1382 = vmatpush1.msra.mxu0 0.0
    %1383 = vmatprep.subr.mxu0 0.0
    %1384 = vmatpush1.msra.mxu0 0.0
    %1385 = vmatprep.subr.mxu0 0.0
    %1386 = vmatpush1.msra.mxu0 0.0
    %1387 = vmatprep.subr.mxu0 0.0
    %1388 = vmatpush1.msra.mxu0 0.0
    %1389 = vmatprep.subr.mxu0 0.0
    %1390 = vmatpush1.msra.mxu0 0.0
    %1391 = vmatprep.subr.mxu0 0.0
    %1392 = vmatpush1.msra.mxu0 0.0
    %1393 = vmatprep.subr.mxu0 0.0
    %1394 = vmatpush1.msra.mxu0 0.0
    %1395 = vmatprep.subr.mxu0 0.0
    %1396 = vmatpush1.msra.mxu0 0.0
    %1397 = vmatprep.subr.mxu0 0.0
    %1398 = vmatpush1.msra.mxu0 0.0
    %1399 = vmatprep.subr.mxu0 0.0
    %1400 = vmatpush1.msra.mxu0 0.0
    %1401 = vmatprep.subr.mxu0 0.0
    %1402 = vmatpush1.msra.mxu0 0.0
    %1403 = vmatprep.subr.mxu0 0.0
    %1404 = vmatpush1.msra.mxu0 0.0
    %1405 = vmatprep.mubr.f32.mxu0 0.0
    %1406 = vmatmul.mubr.f32.gmra.mrb[0].mxu0 %v430
    %v1407 = vpop.f32.mrb[0].mxu0
    %v1408 = vadd.f32 0.0, %v1407
    %v1409 = vpop.f32.mrb[0].mxu0
    %1410 = vmatprep.mubr.f32.mxu0 0.0
    %1411 = vmatmul.mubr.f32.gmra.mrb[0].mxu0 %v433
    %v1412 = vpop.f32.mrb[0].mxu0
    %v1413 = vadd.f32 0.0, %v1412
    %v1414 = vpop.f32.mrb[0].mxu0
    %1415 = vdwg.mxu0
    %v1416 = vlaneseq
    %v1417 = vshrl.u32 %v1416, 7
    %v1418 = vsub.s32 7, %v1417
    %v1419 = vrot.slane %v16, %v1418
    %1420 = vrot.lane.b32.xlu0 %v15, 64
    %v1421 = vpop.permute.xlu0 %1420
    %1422 = vrot.lane.b32.xlu0 %v16, 64
    %v1423 = vpop.permute.xlu0 %1422
    %1424 = vrot.lane.b32.xlu0 %v17, 64
    %v1425 = vpop.permute.xlu0 %1424
    %1426 = vrot.lane.b32.xlu0 %v18, 64
    %v1427 = vpop.permute.xlu0 %1426
    %1433 = vrot.lane.b32.xlu0 %v1419, 32
    %v1434 = vpop.permute.xlu0 %1433
    %v1437 = vsel %vm518, %v1183, 0
    %v1440 = vsel %vm518, %v1188, 0
    %v1443 = vsel %vm518, %v1258, 0
    %v1446 = vsel %vm518, %v1263, 0
    %v1449 = vsel %vm518, %v1333, 0
    %v1452 = vsel %vm518, %v1338, 0
    %v1455 = vsel %vm518, %v1408, 0
    %v1458 = vsel %vm518, %v1413, 0
    %1460 = vmatprep.subr.mxu0 0.0
    %1461 = vmatpush1.msra.mxu0 %v1421
    %1462 = vmatprep.subr.mxu0 0.0
    %1463 = vmatpush1.msra.mxu0 %v1423
    %1464 = vmatprep.subr.mxu0 0.0
    %1465 = vmatpush1.msra.mxu0 %v1425
    %1466 = vmatprep.subr.mxu0 0.0
    %1467 = vmatpush1.msra.mxu0 %v1427
    %1468 = vmatprep.subr.mxu0 0.0
    %1469 = vmatpush1.msra.mxu0 0.0
    %1470 = vmatprep.subr.mxu0 0.0
    %1471 = vmatpush1.msra.mxu0 0.0
    %1472 = vmatprep.subr.mxu0 0.0
    %1473 = vmatpush1.msra.mxu0 0.0
    %1474 = vmatprep.subr.mxu0 0.0
    %1475 = vmatpush1.msra.mxu0 0.0
    %1476 = vmatprep.subr.mxu0 0.0
    %1477 = vmatpush1.msra.mxu0 0.0
    %1478 = vmatprep.subr.mxu0 0.0
    %1479 = vmatpush1.msra.mxu0 0.0
    %1480 = vmatprep.subr.mxu0 0.0
    %1481 = vmatpush1.msra.mxu0 0.0
    %1482 = vmatprep.subr.mxu0 0.0
    %1483 = vmatpush1.msra.mxu0 0.0
    %1484 = vmatprep.subr.mxu0 0.0
    %1485 = vmatpush1.msra.mxu0 0.0
    %1486 = vmatprep.subr.mxu0 0.0
    %1487 = vmatpush1.msra.mxu0 0.0
    %1488 = vmatprep.subr.mxu0 0.0
    %1489 = vmatpush1.msra.mxu0 0.0
    %1490 = vmatprep.subr.mxu0 0.0
    %1491 = vmatpush1.msra.mxu0 0.0
    %1492 = vmatprep.subr.mxu0 0.0
    %1493 = vmatpush1.msra.mxu0 0.0
    %1494 = vmatprep.subr.mxu0 0.0
    %1495 = vmatpush1.msra.mxu0 0.0
    %1496 = vmatprep.subr.mxu0 0.0
    %1497 = vmatpush1.msra.mxu0 0.0
    %1498 = vmatprep.subr.mxu0 0.0
    %1499 = vmatpush1.msra.mxu0 0.0
    %1500 = vmatprep.subr.mxu0 0.0
    %1501 = vmatpush1.msra.mxu0 0.0
    %1502 = vmatprep.subr.mxu0 0.0
    %1503 = vmatpush1.msra.mxu0 0.0
    %1504 = vmatprep.subr.mxu0 0.0
    %1505 = vmatpush1.msra.mxu0 0.0
    %1506 = vmatprep.subr.mxu0 0.0
    %1507 = vmatpush1.msra.mxu0 0.0
    %1508 = vmatprep.subr.mxu0 0.0
    %1509 = vmatpush1.msra.mxu0 0.0
    %1510 = vmatprep.subr.mxu0 0.0
    %1511 = vmatpush1.msra.mxu0 0.0
    %1512 = vmatprep.subr.mxu0 0.0
    %1513 = vmatpush1.msra.mxu0 0.0
    %1514 = vmatprep.subr.mxu0 0.0
    %1515 = vmatpush1.msra.mxu0 0.0
    %1516 = vmatprep.subr.mxu0 0.0
    %1517 = vmatpush1.msra.mxu0 0.0
    %1518 = vmatprep.subr.mxu0 0.0
    %1519 = vmatpush1.msra.mxu0 0.0
    %1520 = vmatprep.subr.mxu0 0.0
    %1521 = vmatpush1.msra.mxu0 0.0
    %1522 = vmatprep.subr.mxu0 0.0
    %1523 = vmatpush1.msra.mxu0 0.0
    %1524 = vmatprep.mubr.f32.mxu0 0.0
    %1525 = vmatmul.mubr.f32.gmra.mrb[0].mxu0 %v1437
    %v1526 = vpop.f32.mrb[0].mxu0
    %v1527 = vadd.f32 %v1434, %v1526
    %v1528 = vpop.f32.mrb[0].mxu0
    %1529 = vmatprep.mubr.f32.mxu0 0.0
    %1530 = vmatmul.mubr.f32.gmra.mrb[0].mxu0 %v1440
    %v1531 = vpop.f32.mrb[0].mxu0
    %v1532 = vadd.f32 %v1434, %v1531
    %v1533 = vpop.f32.mrb[0].mxu0
    %1534 = vmatprep.mubr.f32.mxu0 0.0
    %1535 = vmatmul.mubr.f32.gmra.mrb[0].mxu0 %v1443
    %v1536 = vpop.f32.mrb[0].mxu0
    %v1537 = vadd.f32 %v1434, %v1536
    %v1538 = vpop.f32.mrb[0].mxu0
    %1539 = vmatprep.mubr.f32.mxu0 0.0
    %1540 = vmatmul.mubr.f32.gmra.mrb[0].mxu0 %v1446
    %v1541 = vpop.f32.mrb[0].mxu0
    %v1542 = vadd.f32 %v1434, %v1541
    %v1543 = vpop.f32.mrb[0].mxu0
    %1544 = vmatprep.mubr.f32.mxu0 0.0
    %1545 = vmatmul.mubr.f32.gmra.mrb[0].mxu0 %v1449
    %v1546 = vpop.f32.mrb[0].mxu0
    %v1547 = vadd.f32 %v1434, %v1546
    %v1548 = vpop.f32.mrb[0].mxu0
    %1549 = vmatprep.mubr.f32.mxu0 0.0
    %1550 = vmatmul.mubr.f32.gmra.mrb[0].mxu0 %v1452
    %v1551 = vpop.f32.mrb[0].mxu0
    %v1552 = vadd.f32 %v1434, %v1551
    %v1553 = vpop.f32.mrb[0].mxu0
    %1554 = vmatprep.mubr.f32.mxu0 0.0
    %1555 = vmatmul.mubr.f32.gmra.mrb[0].mxu0 %v1455
    %v1556 = vpop.f32.mrb[0].mxu0
    %v1557 = vadd.f32 %v1434, %v1556
    %v1558 = vpop.f32.mrb[0].mxu0
    %1559 = vmatprep.mubr.f32.mxu0 0.0
    %1560 = vmatmul.mubr.f32.gmra.mrb[0].mxu0 %v1458
    %v1561 = vpop.f32.mrb[0].mxu0
    %v1562 = vadd.f32 %v1434, %v1561
    %v1563 = vpop.f32.mrb[0].mxu0
    %1564 = vdwg.mxu0
    %v1565 = vmax.f32 %v1527, 0.0
    %v1566 = vmax.f32 %v1532, 0.0
    %v1567 = vmax.f32 %v1537, 0.0
    %v1568 = vmax.f32 %v1542, 0.0
    %v1569 = vmax.f32 %v1547, 0.0
    %v1570 = vmax.f32 %v1552, 0.0
    %v1571 = vmax.f32 %v1557, 0.0
    %v1572 = vmax.f32 %v1562, 0.0
    %v1573 = vsel %vm518, %v1565, 0.0
    %v1574 = vsel %vm518, %v1566, 0.0
    %v1575 = vadd.f32 %v1573, %v1574
    %v1576 = vrot.slane %v1575, 4
    %v1577 = vadd.f32 %v1575, %v1576
    %v1578 = vrot.slane %v1577, 2
    %v1579 = vadd.f32 %v1577, %v1578
    %v1580 = vrot.slane %v1579, 1
    %v1581 = vadd.f32 %v1579, %v1580
    %v1582 = vsel %vm518, %v1567, 0.0
    %v1583 = vsel %vm518, %v1568, 0.0
    %v1584 = vadd.f32 %v1582, %v1583
    %v1585 = vrot.slane %v1584, 4
    %v1586 = vadd.f32 %v1584, %v1585
    %v1587 = vrot.slane %v1586, 2
    %v1588 = vadd.f32 %v1586, %v1587
    %v1589 = vrot.slane %v1588, 1
    %v1590 = vadd.f32 %v1588, %v1589
    %v1591 = vsel %vm518, %v1569, 0.0
    %v1592 = vsel %vm518, %v1570, 0.0
    %v1593 = vadd.f32 %v1591, %v1592
    %v1594 = vrot.slane %v1593, 4
    %v1595 = vadd.f32 %v1593, %v1594
    %v1596 = vrot.slane %v1595, 2
    %v1597 = vadd.f32 %v1595, %v1596
    %v1598 = vrot.slane %v1597, 1
    %v1599 = vadd.f32 %v1597, %v1598
    %v1600 = vsel %vm518, %v1571, 0.0
    %v1601 = vsel %vm518, %v1572, 0.0
    %v1602 = vadd.f32 %v1600, %v1601
    %v1603 = vrot.slane %v1602, 4
    %v1604 = vadd.f32 %v1602, %v1603
    %v1605 = vrot.slane %v1604, 2
    %v1606 = vadd.f32 %v1604, %v1605
    %v1607 = vrot.slane %v1606, 1
    %v1608 = vadd.f32 %v1606, %v1607
    %v1609 = vrcp.pop 16.0
    %v1610 = vmul.f32 %v1581, %v1609
    %v1611 = vmul.f32 %v1590, %v1609
    %v1612 = vmul.f32 %v1599, %v1609
    %v1613 = vmul.f32 %v1608, %v1609
    %v1614 = vlaneseq
    %v1615 = vshrl.u32 %v1614, 7
    %v1616 = vsub.s32 0, %v1615
    %v1617 = vrot.slane %v17, %v1616
    %vm1622 = vcmask 1041409
    %v1623 = vsel %vm1622, %v1611, %v1610
    %vm1624 = vcmask 1042434
    %v1625 = vsel %vm1624, %v1612, %v1623
    %vm1626 = vcmask 1043459
    %v1627 = vsel %vm1626, %v1613, %v1625
    %1628 = vrot.lane.b32.xlu0 %v16, 32
    %v1629 = vpop.permute.xlu0 %1628
    %1631 = vrot.lane.b32.xlu0 %v1617, 32
    %v1632 = vpop.permute.xlu0 %1631
    %v1634 = vsel %vm518, %v1627, 0
    %v1636 = vsel %vm518, %v1629, 0
    %1638 = vmatprep.subr.mxu0 0.0
    %1639 = vmatpush1.xpose.msra.mxu0 %v1636
    %1640 = vmatprep.subr.mxu0 0.0
    %1641 = vmatpush1.xpose.msra.mxu0 0.0
    %1642 = vmatprep.subr.mxu0 0.0
    %1643 = vmatpush1.xpose.msra.mxu0 0.0
    %1644 = vmatprep.subr.mxu0 0.0
    %1645 = vmatpush1.xpose.msra.mxu0 0.0
    %1646 = vmatprep.subr.mxu0 0.0
    %1647 = vmatpush1.xpose.msra.mxu0 0.0
    %1648 = vmatprep.subr.mxu0 0.0
    %1649 = vmatpush1.xpose.msra.mxu0 0.0
    %1650 = vmatprep.subr.mxu0 0.0
    %1651 = vmatpush1.xpose.msra.mxu0 0.0
    %1652 = vmatprep.subr.mxu0 0.0
    %1653 = vmatpush1.xpose.msra.mxu0 0.0
    %1654 = vmatprep.subr.mxu0 0.0
    %1655 = vmatpush1.xpose.msra.mxu0 0.0
    %1656 = vmatprep.subr.mxu0 0.0
    %1657 = vmatpush1.xpose.msra.mxu0 0.0
    %1658 = vmatprep.subr.mxu0 0.0
    %1659 = vmatpush1.xpose.msra.mxu0 0.0
    %1660 = vmatprep.subr.mxu0 0.0
    %1661 = vmatpush1.xpose.msra.mxu0 0.0
    %1662 = vmatprep.subr.mxu0 0.0
    %1663 = vmatpush1.xpose.msra.mxu0 0.0
    %1664 = vmatprep.subr.mxu0 0.0
    %1665 = vmatpush1.xpose.msra.mxu0 0.0
    %1666 = vmatprep.subr.mxu0 0.0
    %1667 = vmatpush1.xpose.msra.mxu0 0.0
    %1668 = vmatprep.subr.mxu0 0.0
    %1669 = vmatpush1.xpose.msra.mxu0 0.0
    %1670 = vmatprep.subr.mxu0 0.0
    %1671 = vmatpush1.xpose.msra.mxu0 0.0
    %1672 = vmatprep.subr.mxu0 0.0
    %1673 = vmatpush1.xpose.msra.mxu0 0.0
    %1674 = vmatprep.subr.mxu0 0.0
    %1675 = vmatpush1.xpose.msra.mxu0 0.0
    %1676 = vmatprep.subr.mxu0 0.0
    %1677 = vmatpush1.xpose.msra.mxu0 0.0
    %1678 = vmatprep.subr.mxu0 0.0
    %1679 = vmatpush1.xpose.msra.mxu0 0.0
    %1680 = vmatprep.subr.mxu0 0.0
    %1681 = vmatpush1.xpose.msra.mxu0 0.0
    %1682 = vmatprep.subr.mxu0 0.0
    %1683 = vmatpush1.xpose.msra.mxu0 0.0
    %1684 = vmatprep.subr.mxu0 0.0
    %1685 = vmatpush1.xpose.msra.mxu0 0.0
    %1686 = vmatprep.subr.mxu0 0.0
    %1687 = vmatpush1.xpose.msra.mxu0 0.0
    %1688 = vmatprep.subr.mxu0 0.0
    %1689 = vmatpush1.xpose.msra.mxu0 0.0
    %1690 = vmatprep.subr.mxu0 0.0
    %1691 = vmatpush1.xpose.msra.mxu0 0.0
    %1692 = vmatprep.subr.mxu0 0.0
    %1693 = vmatpush1.xpose.msra.mxu0 0.0
    %1694 = vmatprep.subr.mxu0 0.0
    %1695 = vmatpush1.xpose.msra.mxu0 0.0
    %1696 = vmatprep.subr.mxu0 0.0
    %1697 = vmatpush1.xpose.msra.mxu0 0.0
    %1698 = vmatprep.subr.mxu0 0.0
    %1699 = vmatpush1.xpose.msra.mxu0 0.0
    %1700 = vmatprep.subr.mxu0 0.0
    %1701 = vmatpush1.xpose.msra.mxu0 0.0
    %1702 = vmatprep.mubr.f32.mxu0 0.0
    %1703 = vmatmul.mubr.f32.gmra.mrb[0].mxu0 %v1634
    %v1704 = vpop.f32.mrb[0].mxu0
    %v1705 = vadd.f32 %v1632, %v1704
    %v1706 = vpop.f32.mrb[0].mxu0
    %1707 = vdwg.mxu0
    %vm1708 = vcmask 27648
    %1709 = vst.msk [vmem:[#allocation2] sm:$0xf] %vm1708, %v1705
    // Predicated region
    $region14: #{forward.1} parent=1 // pred_check
      _
    $region15: #{forward.1} parent=1 // pred_check_branch
      %1711 = sbr.rel (0) target = $region17
    $region16: #{forward.1} parent=1 // pred_region
      %s1713 = ssub.s32 64, 64
      %1714 = vsyncadd [#allocation3], %s1713
      %s1716 = sshll.u32 [#allocation2], 4
      %s1717 = int_to_ptr.vmem [resolvable:$true] %s1716
      %1719 = dma.vmem_to_hbm [thread:$0]  %s1717, 64, %s3, [#allocation3]
    $region17: #{forward.1} parent=1 // pred_fallthru
      _
    // Predicated region
    $region18: #{forward.1} parent=1 // pred_check
      _
    $region19: #{forward.1} parent=1 // pred_check_branch
      %1721 = sbr.rel (0) target = $region21
    $region20: #{forward.1} parent=1 // pred_region
      %1722 = dma.done [#allocation3], 64
    $region21: #{forward.1} parent=1 // pred_fallthru
      _
    %1723 = vsyncpa [#allocation3], 1

</llo_original>
